<compile_context>
chip_gen: v7x
topology: tpu7x:2x2x1
jax: 0.10.0
libtpu: 0.0.40
codegen_flags: <defaults>
</compile_context>

<pallas_src>
import jax
import jax.numpy as jnp
import numpy as np
from jax.experimental import pallas as pl
from jax.experimental.pallas import tpu as pltpu

LANE = 128  # TPU lane width; every fused weight block is padded to this


def attn_decoder_seq_kernel(
    ids_ref,                       # (T, B) int32, SMEM scalar prefetch: token id per step
    emb_tab_ref,                   # (V, 128)     f32  embedding table (gathered in-kernel)
    hid0_ref,                      # (B, 128)     f32  initial hidden, zero-padded beyond H
    enc_ref,                       # (B, S, 128)  f32  encoder states, zero-padded beyond H
    w_emb_ref, b_emb_ref,          # emb-side fused:  [attn | comb]       (128, 2*128) bf16 / f32 bias
    w_hid_ref, b_hid_ref,          # hid-side fused:  [attn | r | z | n]  (128, 4*128) bf16 / f32 bias
    w_comb_a_ref,                  # attn_applied -> attn_combine         (128, 128)   bf16
    w_x_ref, b_x_ref,              # GRU input-hidden fused: [r | z | n]  (128, 3*128) bf16 / f32 bias
    w_out_ref, b_out_ref,          # output projection                    (128, 128)   bf16 / f32 bias
    slab_ref,                      # (B, 3*128)   f32  packed step-t output: [attn_w | h_new | out]
    hid_scr,                       # (B, 128)     f32  VMEM scratch: hidden carried across steps
):
    t = pl.program_id(0)
    B = hid0_ref.shape[0]
    S = enc_ref.shape[1]
    bf16 = jnp.bfloat16

    @pl.when(t == 0)
    def _():
        hid_scr[...] = hid0_ref[...]          # zero padding beyond H is preserved by the carry

    hid = hid_scr[...]                         # (B, 128) f32

    # In-kernel embedding gather (rows are 128-lane dense); dropout = identity (eval mode).
    emb = jnp.concatenate(
        [emb_tab_ref[pl.ds(ids_ref[t, b], 1), :] for b in range(B)], axis=0)   # (B, 128)

    # Two wide bf16 MXU matmuls (f32 accumulate) cover: attention logits, attn_combine's
    # emb half, and all three hidden-side GRU gates.  f32 biases carry the -1e30 softmax
    # mask for padded lanes, added AFTER the dot so the mask / softmax math stays exact f32.
    g_e = jnp.dot(emb.astype(bf16), w_emb_ref[...],
                  preferred_element_type=jnp.float32) + b_emb_ref[...]
    g_h = jnp.dot(hid.astype(bf16), w_hid_ref[...],
                  preferred_element_type=jnp.float32) + b_hid_ref[...]

    # Attention softmax over the 128-lane block (padded lanes -> prob exactly 0).
    logits = g_e[:, 0:LANE] + g_h[:, 0:LANE]
    m = jnp.max(logits, axis=1, keepdims=True)
    e = jnp.exp(logits - m)
    attn_w = e / jnp.sum(e, axis=1, keepdims=True)        # exact divide (review)
    slab_ref[:, 0:LANE] = attn_w

    # Apply attention: per-batch (1,S)x(S,128) MXU dots replace the previous serial
    # S-step dependent VPU add chain (independent dots; the reduction happens on the MXU).
    # Contraction length S == crop to S without renormalization, per reference semantics.
    attn_applied = jnp.concatenate(
        [jnp.dot(attn_w[b:b + 1, 0:S], enc_ref[b],
                 preferred_element_type=jnp.float32) for b in range(B)], axis=0)  # (B, 128)

    # attn_combine + ReLU (emb half already computed in g_e block 1).
    comb = g_e[:, LANE:2 * LANE] + jnp.dot(
        attn_applied.astype(bf16), w_comb_a_ref[...], preferred_element_type=jnp.float32)
    x = jnp.maximum(comb, 0.0)                             # (B, 128) GRU input

    # Single-layer GRU cell, PyTorch gate order (r, z, n); one fused input matmul.
    g_x = jnp.dot(x.astype(bf16), w_x_ref[...],
                  preferred_element_type=jnp.float32) + b_x_ref[...]
    i_r, i_z, i_n = g_x[:, 0:LANE], g_x[:, LANE:2 * LANE], g_x[:, 2 * LANE:3 * LANE]
    h_r, h_z, h_n = g_h[:, LANE:2 * LANE], g_h[:, 2 * LANE:3 * LANE], g_h[:, 3 * LANE:4 * LANE]

    r = jax.nn.sigmoid(i_r + h_r)              # r/z biases (b_ih+b_hh) pre-folded into h_r/h_z
    z = jax.nn.sigmoid(i_z + h_z)
    n = jnp.tanh(i_n + r * h_n)                # i_n carries b_ih_n; h_n carries b_hh_n
    h_new = (1.0 - z) * n + z * hid            # padded lanes stay exactly 0 (zero-padded blocks)
    hid_scr[...] = h_new                       # in-VMEM hidden carry to the next timestep
    slab_ref[:, LANE:2 * LANE] = h_new

    # Output projection.
    slab_ref[:, 2 * LANE:3 * LANE] = (
        jnp.dot(h_new.astype(bf16), w_out_ref[...],
                preferred_element_type=jnp.float32) + b_out_ref[...])


def _pad2(x, rows, cols):
    r, c = x.shape
    return jnp.pad(x, ((0, rows - r), (0, cols - c)))


def fuse_params(params):
    """Operand-fused, 128-lane-padded weights the kernel consumes.
    Matmul weights are bf16 (MXU fast path on v5e/v6e/v7x, half the weight DMA);
    biases and all elementwise math remain f32."""
    H = params["w_comb_e"].shape[0]
    L = params["w_attn_e"].shape[1]
    O = params["w_out"].shape[1]
    assert H <= LANE and L <= LANE and O <= LANE  # TODO(synk): tile lane blocks for larger sizes
    f32, bf16 = jnp.float32, jnp.bfloat16

    # operand = embedded input: [attn logits | attn_combine].  Padded attention lanes get a
    # -1e30 bias (kept in the f32 bias) so the 128-wide softmax equals a softmax over L lanes.
    w_emb = jnp.concatenate([_pad2(params["w_attn_e"], LANE, LANE),
                             _pad2(params["w_comb_e"], LANE, LANE)], axis=1)
    b_attn_masked = jnp.concatenate(
        [params["b_attn"], jnp.full((1, LANE - L), -1e30, f32)], axis=1)
    b_emb = jnp.concatenate([b_attn_masked, _pad2(params["b_comb"], 1, LANE)], axis=1)

    # operand = previous hidden (zero-padded to 128 lanes): [attn | GRU r | z | n]
    w_hid = jnp.concatenate(
        [_pad2(params["w_attn_h"], LANE, LANE)]
        + [_pad2(params["w_hh"][i], LANE, LANE) for i in range(3)], axis=1)
    b_hid = jnp.concatenate(
        [jnp.zeros((1, LANE), f32),
         _pad2((params["b_ih"][0] + params["b_hh"][0])[None, :], 1, LANE),
         _pad2((params["b_ih"][1] + params["b_hh"][1])[None, :], 1, LANE),
         _pad2(params["b_hh"][2][None, :], 1, LANE)], axis=1)

    # operand = GRU input x = relu(attn_combine): [r | z | n]
    w_x = jnp.concatenate([_pad2(params["w_ih"][i], LANE, LANE) for i in range(3)], axis=1)
    b_x = jnp.concatenate([jnp.zeros((1, 2 * LANE), f32),
                           _pad2(params["b_ih"][2][None, :], 1, LANE)], axis=1)

    V = params["embedding"].shape[0]
    return {
        # f32 table: dynamic-sublane gather in-kernel stays on a 32-bit dtype.
        "emb_table": _pad2(params["embedding"], V, LANE),
        "W_emb": w_emb.astype(bf16), "b_emb": b_emb,
        "W_hid": w_hid.astype(bf16), "b_hid": b_hid,
        "W_comb_a": _pad2(params["w_comb_a"], LANE, LANE).astype(bf16),
        "W_x": w_x.astype(bf16), "b_x": b_x,
        "W_out": _pad2(params["w_out"], LANE, LANE).astype(bf16),
        "b_out": _pad2(params["b_out"], 1, LANE),
        "H": H, "L": L, "O": O,
    }


def attention_decoder_decode(fp, token_ids, hidden_input, encoder_hiddens):
    """Run T decode steps (teacher-forced token_ids) in ONE pallas_call.

    token_ids: (T, B) int32; hidden_input: (1, B, H); encoder_hiddens: (S, B, H).
    Returns (outputs (T, B, O), hidden (1, B, H), attn_weights (T, B, L))."""
    T, B = token_ids.shape
    H, L, O = fp["H"], fp["L"], fp["O"]
    S = encoder_hiddens.shape[0]
    assert S <= L

    hid0 = jnp.pad(hidden_input[0], ((0, 0), (0, LANE - H)))                   # (B, 128)
    # Encoder repacked ONCE per decode call (amortized over T steps) into a lane/sublane
    # dense (B, S, 128) slab so each enc_ref[b] is a clean (S,128) vreg tile.
    enc = jnp.pad(jnp.transpose(encoder_hiddens, (1, 0, 2)),
                  ((0, 0), (0, 0), (0, LANE - H)))                             # (B, S, 128)

    def const_spec(shape):
        nd = len(shape)
        # Constant block index across the whole grid => DMA'd once, VMEM-resident for all T steps.
        return pl.BlockSpec(shape, lambda *_: (0,) * nd)

    weight_args = (fp["W_emb"], fp["b_emb"], fp["W_hid"], fp["b_hid"],
                   fp["W_comb_a"], fp["W_x"], fp["b_x"], fp["W_out"], fp["b_out"])
    in_specs = ([const_spec(fp["emb_table"].shape), const_spec(hid0.shape), const_spec(enc.shape)]
                + [const_spec(w.shape) for w in weight_args])

    grid_spec = pltpu.PrefetchScalarGridSpec(
        num_scalar_prefetch=1,                       # token ids land in SMEM
        grid=(T,),                                   # one grid step per decode timestep
        in_specs=in_specs,
        out_specs=pl.BlockSpec((None, B, 3 * LANE), lambda t, ids: (t, 0, 0)),
        scratch_shapes=[pltpu.VMEM((B, LANE), jnp.float32)],   # hidden carry across steps
    )
    slab = pl.pallas_call(
        attn_decoder_seq_kernel,
        out_shape=jax.ShapeDtypeStruct((T, B, 3 * LANE), jnp.float32),
        grid_spec=grid_spec,
        compiler_params=pltpu.CompilerParams(dimension_semantics=("arbitrary",)),
    )(token_ids, fp["emb_table"], hid0, enc, *weight_args)

    attn_w = slab[:, :, 0:L]                        # (T, B, L)
    h_last = slab[T - 1, :, LANE:LANE + H]          # (B, H)
    out = slab[:, :, 2 * LANE:2 * LANE + O]         # (T, B, O)
    return out, h_last[None, :, :], attn_w


def attention_decoder_forward(fp, decoder_input, hidden_input, encoder_hiddens):
    """Single decode step matching the PyTorch forward signature.
    decoder_input: (B, 1) int32; hidden_input: (1, B, H); encoder_hiddens: (S, B, H).
    Returns (output (B,1,O), hidden (1,B,H), attn_weights (B,1,L))."""
    outs, h_last, attns = attention_decoder_decode(
        fp, decoder_input[:, 0][None, :], hidden_input, encoder_hiddens)
    return outs[0][:, None, :], h_last, attns[0][:, None, :]


def reference_forward(params, decoder_input, hidden_input, encoder_hiddens):
    """Pure-JAX f32 reference matching the PyTorch forward (eval mode)."""
    hid = hidden_input[0]
    emb = params["embedding"][decoder_input[:, 0]]
    cat1 = jnp.concatenate([emb, hid], axis=1)
    W_attn = jnp.concatenate([params["w_attn_e"], params["w_attn_h"]], axis=0)
    attn_w = jax.nn.softmax(cat1 @ W_attn + params["b_attn"][0], axis=1)
    enc_t = jnp.transpose(encoder_hiddens, (1, 0, 2))
    S = enc_t.shape[1]
    attn_applied = jnp.einsum("bs,bsh->bh", attn_w[:, :S], enc_t)
    cat2 = jnp.concatenate([emb, attn_applied], axis=1)
    W_comb = jnp.concatenate([params["w_comb_e"], params["w_comb_a"]], axis=0)
    x = jax.nn.relu(cat2 @ W_comb + params["b_comb"][0])
    gi = jnp.stack([x @ params["w_ih"][i] + params["b_ih"][i] for i in range(3)])
    gh = jnp.stack([hid @ params["w_hh"][i] + params["b_hh"][i] for i in range(3)])
    r = jax.nn.sigmoid(gi[0] + gh[0])
    z = jax.nn.sigmoid(gi[1] + gh[1])
    n = jnp.tanh(gi[2] + r * gh[2])
    h_new = (1.0 - z) * n + z * hid
    out = h_new @ params["w_out"] + params["b_out"][0]
    return out[:, None, :], h_new[None, :, :], attn_w[:, None, :]


def init_params(key, vocab, H, L, O):
    ks = jax.random.split(key, 12)
    u = lambda k, shape, s: jax.random.uniform(k, shape, jnp.float32, -s, s)
    return {
        "embedding": jax.random.normal(ks[0], (vocab, H), jnp.float32) * 0.1,
        "w_attn_e": u(ks[1], (H, L), 0.1),
        "w_attn_h": u(ks[2], (H, L), 0.1),
        "b_attn":   u(ks[3], (1, L), 0.1),
        "w_comb_e": u(ks[4], (H, H), 0.1),
        "w_comb_a": u(ks[5], (H, H), 0.1),
        "b_comb":   u(ks[6], (1, H), 0.1),
        "w_ih":     u(ks[7], (3, H, H), 0.1),
        "w_hh":     u(ks[8], (3, H, H), 0.1),
        "b_ih":     u(ks[9], (3, H), 0.1),
        "b_hh":     u(ks[10], (3, H), 0.1),
        "w_out":    u(ks[11], (H, O), 0.1),
        "b_out":    jnp.zeros((1, O), jnp.float32),
    }


if __name__ == "__main__":
    # batch, hidden, enc_len, max_length, output, vocab, decode steps
    B, H, S, L, O, VOCAB, T = 2, 32, 8, 16, 10, 20, 4

    key = jax.random.PRNGKey(0)
    kp, k1, k2, k3 = jax.random.split(key, 4)
    params = init_params(kp, VOCAB, H, L, O)
    fused = fuse_params(params)

    token_seq = jax.random.randint(k1, (T, B), 0, VOCAB, dtype=jnp.int32)
    hidden_input = jax.random.normal(k2, (1, B, H), jnp.float32)
    encoder_hiddens = jax.random.normal(k3, (S, B, H), jnp.float32)

    # Tolerance reflects bf16 matmul weights (intentional, per perf review); the softmax
    # reciprocal is now exact and all elementwise math is f32.
    tol = dict(rtol=3e-2, atol=3e-2)

    # --- single step (matches the PyTorch forward signature) -------------------------
    decoder_input = token_seq[0][:, None]                            # (B, 1)
    out, hidden, attn_w = attention_decoder_forward(
        fused, decoder_input, hidden_input, encoder_hiddens)
    jax.block_until_ready((out, hidden, attn_w))

    r_out, r_hidden, r_attn = reference_forward(
        params, decoder_input, hidden_input, encoder_hiddens)
    np.testing.assert_allclose(np.asarray(out), np.asarray(r_out), **tol)
    np.testing.assert_allclose(np.asarray(hidden), np.asarray(r_hidden), **tol)
    np.testing.assert_allclose(np.asarray(attn_w), np.asarray(r_attn), **tol)

    # --- fused multi-step decode: T steps, one pallas_call, hidden carried in VMEM ---
    outs, h_last, attns = attention_decoder_decode(
        fused, token_seq, hidden_input, encoder_hiddens)
    jax.block_until_ready((outs, h_last, attns))

    hid_carry = hidden_input
    for t in range(T):
        r_out, hid_carry, r_attn = reference_forward(
            params, token_seq[t][:, None], hid_carry, encoder_hiddens)
        np.testing.assert_allclose(np.asarray(outs[t]), np.asarray(r_out[:, 0, :]), **tol)
        np.testing.assert_allclose(np.asarray(attns[t]), np.asarray(r_attn[:, 0, :]), **tol)
    np.testing.assert_allclose(np.asarray(h_last), np.asarray(hid_carry), **tol)

    print("KERNEL_OK")
</pallas_src>

<mosaic_0001>
module attributes {stable_mosaic.version = 11 : i64} {
  func.func @attn_decoder_seq_kernel(%arg0: i32, %arg1: memref<1x2xi32, #tpu.memory_space<smem>>, %arg2: memref<20x128xf32, #tpu.memory_space<vmem>>, %arg3: memref<2x128xf32, #tpu.memory_space<vmem>>, %arg4: memref<2x8x128xf32, #tpu.memory_space<vmem>>, %arg5: memref<128x256xbf16, #tpu.memory_space<vmem>>, %arg6: memref<1x256xf32, #tpu.memory_space<vmem>>, %arg7: memref<128x512xbf16, #tpu.memory_space<vmem>>, %arg8: memref<1x512xf32, #tpu.memory_space<vmem>>, %arg9: memref<128x128xbf16, #tpu.memory_space<vmem>>, %arg10: memref<128x384xbf16, #tpu.memory_space<vmem>>, %arg11: memref<1x384xf32, #tpu.memory_space<vmem>>, %arg12: memref<128x128xbf16, #tpu.memory_space<vmem>>, %arg13: memref<1x128xf32, #tpu.memory_space<vmem>>, %arg14: memref<1x2x384xf32, #tpu.memory_space<vmem>>, %arg15: memref<2x128xf32, #tpu.memory_space<vmem>>) attributes {dimension_semantics = [#tpu.dimension_semantics<arbitrary>], iteration_bounds = array<i64: 1>, scalar_prefetch = 1 : i64, scratch_operands = 1 : i64, tpu.core_type = #tpu.core_type<tc>, window_params = [{pipeline_mode = #tpu.pipeline_mode<synchronous>, transform_indices = @transform_0, window_bounds = array<i64: 20, 128>}, {pipeline_mode = #tpu.pipeline_mode<synchronous>, transform_indices = @transform_1, window_bounds = array<i64: 2, 128>}, {pipeline_mode = #tpu.pipeline_mode<synchronous>, transform_indices = @transform_2, window_bounds = array<i64: 2, 8, 128>}, {pipeline_mode = #tpu.pipeline_mode<synchronous>, transform_indices = @transform_3, window_bounds = array<i64: 128, 256>}, {pipeline_mode = #tpu.pipeline_mode<synchronous>, transform_indices = @transform_4, window_bounds = array<i64: 1, 256>}, {pipeline_mode = #tpu.pipeline_mode<synchronous>, transform_indices = @transform_5, window_bounds = array<i64: 128, 512>}, {pipeline_mode = #tpu.pipeline_mode<synchronous>, transform_indices = @transform_6, window_bounds = array<i64: 1, 512>}, {pipeline_mode = #tpu.pipeline_mode<synchronous>, transform_indices = @transform_7, window_bounds = array<i64: 128, 128>}, {pipeline_mode = #tpu.pipeline_mode<synchronous>, transform_indices = @transform_8, window_bounds = array<i64: 128, 384>}, {pipeline_mode = #tpu.pipeline_mode<synchronous>, transform_indices = @transform_9, window_bounds = array<i64: 1, 384>}, {pipeline_mode = #tpu.pipeline_mode<synchronous>, transform_indices = @transform_10, window_bounds = array<i64: 128, 128>}, {pipeline_mode = #tpu.pipeline_mode<synchronous>, transform_indices = @transform_11, window_bounds = array<i64: 1, 128>}, {transform_indices = @transform_12, window_bounds = array<i64: 1, 2, 384>}]} {
    %c0_i32 = arith.constant 0 : i32
    %0 = arith.cmpi eq, %arg0, %c0_i32 : i32
    %1 = arith.extui %0 : i1 to i32
    %c0_i32_0 = arith.constant 0 : i32
    %2 = arith.cmpi ne, %1, %c0_i32_0 : i32
    scf.if %2 {
      %c0_50 = arith.constant 0 : index
      %c0_51 = arith.constant 0 : index
      %101 = vector.load %arg3[%c0_50, %c0_51] : memref<2x128xf32, #tpu.memory_space<vmem>>, vector<2x128xf32>
      %c0_52 = arith.constant 0 : index
      %c0_53 = arith.constant 0 : index
      %102 = vector.load %arg15[%c0_52, %c0_53] : memref<2x128xf32, #tpu.memory_space<vmem>>, vector<2x128xf32>
      tpu.vector_store %arg15[%c0_52, %c0_53], %101 {strides = array<i32>} : memref<2x128xf32, #tpu.memory_space<vmem>>, vector<2x128xf32>,
    } else {
    }
    %c0 = arith.constant 0 : index
    %c0_1 = arith.constant 0 : index
    %3 = vector.load %arg15[%c0, %c0_1] : memref<2x128xf32, #tpu.memory_space<vmem>>, vector<2x128xf32>
    %4 = arith.index_cast %arg0 : i32 to index
    %c0_2 = arith.constant 0 : index
    %5 = memref.load %arg1[%4, %c0_2] : memref<1x2xi32, #tpu.memory_space<smem>>
    %6 = arith.index_cast %5 : i32 to index
    %c0_3 = arith.constant 0 : index
    %7 = vector.load %arg2[%6, %c0_3] : memref<20x128xf32, #tpu.memory_space<vmem>>, vector<1x128xf32>
    %8 = arith.index_cast %arg0 : i32 to index
    %c1 = arith.constant 1 : index
    %9 = memref.load %arg1[%8, %c1] : memref<1x2xi32, #tpu.memory_space<smem>>
    %10 = arith.index_cast %9 : i32 to index
    %c0_4 = arith.constant 0 : index
    %11 = vector.load %arg2[%10, %c0_4] : memref<20x128xf32, #tpu.memory_space<vmem>>, vector<1x128xf32>
    %12 = tpu.concatenate %7, %11 in 0 : vector<1x128xf32>, vector<1x128xf32> -> vector<2x128xf32>
    %13 = arith.truncf %12 : vector<2x128xf32> to vector<2x128xbf16>
    %c0_5 = arith.constant 0 : index
    %c0_6 = arith.constant 0 : index
    %14 = vector.load %arg5[%c0_5, %c0_6] : memref<128x256xbf16, #tpu.memory_space<vmem>>, vector<128x256xbf16>
    %cst = arith.constant dense<0.000000e+00> : vector<2x256xf32>
    %15 = tpu.matmul %13, %14, %cst {dimension_numbers = #tpu.dot_dimension_numbers<[1], [0], [0], [1], [0, 0, 1, 1], [], []>} : vector<2x128xbf16>, vector<128x256xbf16>, vector<2x256xf32> -> vector<2x256xf32>
    %c0_7 = arith.constant 0 : index
    %c0_8 = arith.constant 0 : index
    %16 = vector.load %arg6[%c0_7, %c0_8] : memref<1x256xf32, #tpu.memory_space<vmem>>, vector<1x256xf32>
    %17 = vector.broadcast %16 : vector<1x256xf32> to vector<2x256xf32>
    %18 = arith.addf %15, %17 : vector<2x256xf32>
    %19 = arith.truncf %3 : vector<2x128xf32> to vector<2x128xbf16>
    %c0_9 = arith.constant 0 : index
    %c0_10 = arith.constant 0 : index
    %20 = vector.load %arg7[%c0_9, %c0_10] : memref<128x512xbf16, #tpu.memory_space<vmem>>, vector<128x512xbf16>
    %cst_11 = arith.constant dense<0.000000e+00> : vector<2x512xf32>
    %21 = tpu.matmul %19, %20, %cst_11 {dimension_numbers = #tpu.dot_dimension_numbers<[1], [0], [0], [1], [0, 0, 1, 1], [], []>} : vector<2x128xbf16>, vector<128x512xbf16>, vector<2x512xf32> -> vector<2x512xf32>
    %c0_12 = arith.constant 0 : index
    %c0_13 = arith.constant 0 : index
    %22 = vector.load %arg8[%c0_12, %c0_13] : memref<1x512xf32, #tpu.memory_space<vmem>>, vector<1x512xf32>
    %23 = vector.broadcast %22 : vector<1x512xf32> to vector<2x512xf32>
    %24 = arith.addf %21, %23 : vector<2x512xf32>
    %25 = vector.extract_strided_slice %18 {offsets = [0, 0], sizes = [2, 128], strides = [1, 1]} : vector<2x256xf32> to vector<2x128xf32>
    %26 = vector.extract_strided_slice %24 {offsets = [0, 0], sizes = [2, 128], strides = [1, 1]} : vector<2x512xf32> to vector<2x128xf32>
    %27 = arith.addf %25, %26 : vector<2x128xf32>
    %cst_14 = arith.constant dense<0xFF800000> : vector<2xf32>
    %28 = vector.multi_reduction <maximumf>, %27, %cst_14 [1] : vector<2x128xf32> to vector<2xf32>
    %29 = vector.shape_cast %28 : vector<2xf32> to vector<2x1xf32>
    %30 = vector.broadcast %29 : vector<2x1xf32> to vector<2x128xf32>
    %31 = arith.subf %27, %30 : vector<2x128xf32>
    %32 = math.exp %31 : vector<2x128xf32>
    %cst_15 = arith.constant dense<0.000000e+00> : vector<2xf32>
    %33 = vector.multi_reduction <add>, %32, %cst_15 [1] : vector<2x128xf32> to vector<2xf32>
    %34 = vector.shape_cast %33 : vector<2xf32> to vector<2x1xf32>
    %35 = vector.broadcast %34 : vector<2x1xf32> to vector<2x128xf32>
    %36 = arith.divf %32, %35 : vector<2x128xf32>
    %c0_16 = arith.constant 0 : index
    %c0_17 = arith.constant 0 : index
    %c0_18 = arith.constant 0 : index
    %37 = vector.load %arg14[%c0_16, %c0_17, %c0_18] : memref<1x2x384xf32, #tpu.memory_space<vmem>>, vector<1x2x128xf32>
    %38 = vector.shape_cast %37 : vector<1x2x128xf32> to vector<2x128xf32>
    %39 = vector.shape_cast %36 : vector<2x128xf32> to vector<1x2x128xf32>
    tpu.vector_store %arg14[%c0_16, %c0_17, %c0_18], %39 {strides = array<i32>} : memref<1x2x384xf32, #tpu.memory_space<vmem>>, vector<1x2x128xf32>,
    %40 = vector.extract_strided_slice %36 {offsets = [0, 0], sizes = [1, 8], strides = [1, 1]} : vector<2x128xf32> to vector<1x8xf32>
    %c0_19 = arith.constant 0 : index
    %c0_20 = arith.constant 0 : index
    %c0_21 = arith.constant 0 : index
    %41 = vector.load %arg4[%c0_19, %c0_20, %c0_21] : memref<2x8x128xf32, #tpu.memory_space<vmem>>, vector<1x8x128xf32>
    %42 = vector.shape_cast %41 : vector<1x8x128xf32> to vector<8x128xf32>
    %cst_22 = arith.constant dense<0.000000e+00> : vector<1x128xf32>
    %43 = tpu.matmul %40, %42, %cst_22 {dimension_numbers = #tpu.dot_dimension_numbers<[1], [0], [0], [1], [0, 0, 1, 1], [], []>} : vector<1x8xf32>, vector<8x128xf32>, vector<1x128xf32> -> vector<1x128xf32>
    %44 = vector.extract_strided_slice %36 {offsets = [1, 0], sizes = [1, 8], strides = [1, 1]} : vector<2x128xf32> to vector<1x8xf32>
    %c1_23 = arith.constant 1 : index
    %c0_24 = arith.constant 0 : index
    %c0_25 = arith.constant 0 : index
    %45 = vector.load %arg4[%c1_23, %c0_24, %c0_25] : memref<2x8x128xf32, #tpu.memory_space<vmem>>, vector<1x8x128xf32>
    %46 = vector.shape_cast %45 : vector<1x8x128xf32> to vector<8x128xf32>
    %cst_26 = arith.constant dense<0.000000e+00> : vector<1x128xf32>
    %47 = tpu.matmul %44, %46, %cst_26 {dimension_numbers = #tpu.dot_dimension_numbers<[1], [0], [0], [1], [0, 0, 1, 1], [], []>} : vector<1x8xf32>, vector<8x128xf32>, vector<1x128xf32> -> vector<1x128xf32>
    %48 = tpu.concatenate %43, %47 in 0 : vector<1x128xf32>, vector<1x128xf32> -> vector<2x128xf32>
    %49 = vector.extract_strided_slice %18 {offsets = [0, 128], sizes = [2, 128], strides = [1, 1]} : vector<2x256xf32> to vector<2x128xf32>
    %50 = arith.truncf %48 : vector<2x128xf32> to vector<2x128xbf16>
    %c0_27 = arith.constant 0 : index
    %c0_28 = arith.constant 0 : index
    %51 = vector.load %arg9[%c0_27, %c0_28] : memref<128x128xbf16, #tpu.memory_space<vmem>>, vector<128x128xbf16>
    %cst_29 = arith.constant dense<0.000000e+00> : vector<2x128xf32>
    %52 = tpu.matmul %50, %51, %cst_29 {dimension_numbers = #tpu.dot_dimension_numbers<[1], [0], [0], [1], [0, 0, 1, 1], [], []>} : vector<2x128xbf16>, vector<128x128xbf16>, vector<2x128xf32> -> vector<2x128xf32>
    %53 = arith.addf %49, %52 : vector<2x128xf32>
    %cst_30 = arith.constant 0.000000e+00 : f32
    %54 = vector.broadcast %cst_30 : f32 to vector<2x128xf32>
    %55 = arith.maximumf %53, %54 : vector<2x128xf32>
    %56 = arith.truncf %55 : vector<2x128xf32> to vector<2x128xbf16>
    %c0_31 = arith.constant 0 : index
    %c0_32 = arith.constant 0 : index
    %57 = vector.load %arg10[%c0_31, %c0_32] : memref<128x384xbf16, #tpu.memory_space<vmem>>, vector<128x384xbf16>
    %cst_33 = arith.constant dense<0.000000e+00> : vector<2x384xf32>
    %58 = tpu.matmul %56, %57, %cst_33 {dimension_numbers = #tpu.dot_dimension_numbers<[1], [0], [0], [1], [0, 0, 1, 1], [], []>} : vector<2x128xbf16>, vector<128x384xbf16>, vector<2x384xf32> -> vector<2x384xf32>
    %c0_34 = arith.constant 0 : index
    %c0_35 = arith.constant 0 : index
    %59 = vector.load %arg11[%c0_34, %c0_35] : memref<1x384xf32, #tpu.memory_space<vmem>>, vector<1x384xf32>
    %60 = vector.broadcast %59 : vector<1x384xf32> to vector<2x384xf32>
    %61 = arith.addf %58, %60 : vector<2x384xf32>
    %62 = vector.extract_strided_slice %61 {offsets = [0, 0], sizes = [2, 128], strides = [1, 1]} : vector<2x384xf32> to vector<2x128xf32>
    %63 = vector.extract_strided_slice %61 {offsets = [0, 128], sizes = [2, 128], strides = [1, 1]} : vector<2x384xf32> to vector<2x128xf32>
    %64 = vector.extract_strided_slice %61 {offsets = [0, 256], sizes = [2, 128], strides = [1, 1]} : vector<2x384xf32> to vector<2x128xf32>
    %65 = vector.extract_strided_slice %24 {offsets = [0, 128], sizes = [2, 128], strides = [1, 1]} : vector<2x512xf32> to vector<2x128xf32>
    %66 = vector.extract_strided_slice %24 {offsets = [0, 256], sizes = [2, 128], strides = [1, 1]} : vector<2x512xf32> to vector<2x128xf32>
    %67 = vector.extract_strided_slice %24 {offsets = [0, 384], sizes = [2, 128], strides = [1, 1]} : vector<2x512xf32> to vector<2x128xf32>
    %68 = arith.addf %62, %65 : vector<2x128xf32>
    %69 = arith.negf %68 : vector<2x128xf32>
    %70 = math.exp %69 : vector<2x128xf32>
    %cst_36 = arith.constant 1.000000e+00 : f32
    %71 = vector.broadcast %cst_36 : f32 to vector<2x128xf32>
    %72 = arith.addf %71, %70 : vector<2x128xf32>
    %73 = arith.divf %71, %72 : vector<2x128xf32>
    %74 = arith.addf %63, %66 : vector<2x128xf32>
    %75 = arith.negf %74 : vector<2x128xf32>
    %76 = math.exp %75 : vector<2x128xf32>
    %cst_37 = arith.constant 1.000000e+00 : f32
    %77 = vector.broadcast %cst_37 : f32 to vector<2x128xf32>
    %78 = arith.addf %77, %76 : vector<2x128xf32>
    %79 = arith.divf %77, %78 : vector<2x128xf32>
    %80 = arith.mulf %73, %67 : vector<2x128xf32>
    %81 = arith.addf %64, %80 : vector<2x128xf32>
    %82 = math.tanh %81 : vector<2x128xf32>
    %cst_38 = arith.constant 1.000000e+00 : f32
    %83 = vector.broadcast %cst_38 : f32 to vector<2x128xf32>
    %84 = arith.subf %83, %79 : vector<2x128xf32>
    %85 = arith.mulf %84, %82 : vector<2x128xf32>
    %86 = arith.mulf %79, %3 : vector<2x128xf32>
    %87 = arith.addf %85, %86 : vector<2x128xf32>
    %c0_39 = arith.constant 0 : index
    %c0_40 = arith.constant 0 : index
    %88 = vector.load %arg15[%c0_39, %c0_40] : memref<2x128xf32, #tpu.memory_space<vmem>>, vector<2x128xf32>
    tpu.vector_store %arg15[%c0_39, %c0_40], %87 {strides = array<i32>} : memref<2x128xf32, #tpu.memory_space<vmem>>, vector<2x128xf32>,
    %c0_41 = arith.constant 0 : index
    %c0_42 = arith.constant 0 : index
    %c128 = arith.constant 128 : index
    %89 = vector.load %arg14[%c0_41, %c0_42, %c128] : memref<1x2x384xf32, #tpu.memory_space<vmem>>, vector<1x2x128xf32>
    %90 = vector.shape_cast %89 : vector<1x2x128xf32> to vector<2x128xf32>
    %91 = vector.shape_cast %87 : vector<2x128xf32> to vector<1x2x128xf32>
    tpu.vector_store %arg14[%c0_41, %c0_42, %c128], %91 {strides = array<i32>} : memref<1x2x384xf32, #tpu.memory_space<vmem>>, vector<1x2x128xf32>,
    %92 = arith.truncf %87 : vector<2x128xf32> to vector<2x128xbf16>
    %c0_43 = arith.constant 0 : index
    %c0_44 = arith.constant 0 : index
    %93 = vector.load %arg12[%c0_43, %c0_44] : memref<128x128xbf16, #tpu.memory_space<vmem>>, vector<128x128xbf16>
    %cst_45 = arith.constant dense<0.000000e+00> : vector<2x128xf32>
    %94 = tpu.matmul %92, %93, %cst_45 {dimension_numbers = #tpu.dot_dimension_numbers<[1], [0], [0], [1], [0, 0, 1, 1], [], []>} : vector<2x128xbf16>, vector<128x128xbf16>, vector<2x128xf32> -> vector<2x128xf32>
    %c0_46 = arith.constant 0 : index
    %c0_47 = arith.constant 0 : index
    %95 = vector.load %arg13[%c0_46, %c0_47] : memref<1x128xf32, #tpu.memory_space<vmem>>, vector<1x128xf32>
    %96 = vector.broadcast %95 : vector<1x128xf32> to vector<2x128xf32>
    %97 = arith.addf %94, %96 : vector<2x128xf32>
    %c0_48 = arith.constant 0 : index
    %c0_49 = arith.constant 0 : index
    %c256 = arith.constant 256 : index
    %98 = vector.load %arg14[%c0_48, %c0_49, %c256] : memref<1x2x384xf32, #tpu.memory_space<vmem>>, vector<1x2x128xf32>
    %99 = vector.shape_cast %98 : vector<1x2x128xf32> to vector<2x128xf32>
    %100 = vector.shape_cast %97 : vector<2x128xf32> to vector<1x2x128xf32>
    tpu.vector_store %arg14[%c0_48, %c0_49, %c256], %100 {strides = array<i32>} : memref<1x2x384xf32, #tpu.memory_space<vmem>>, vector<1x2x128xf32>,
    return
  }
  func.func @transform_0(%arg0: i32, %arg1: memref<1x2xi32, #tpu.memory_space<smem>>) -> (i32, i32) {
    %c0_i32 = arith.constant 0 : i32
    %c0_i32_0 = arith.constant 0 : i32
    %c0_i32_1 = arith.constant 0 : i32
    return %c0_i32, %c0_i32_0 : i32, i32
  }
  func.func @transform_1(%arg0: i32, %arg1: memref<1x2xi32, #tpu.memory_space<smem>>) -> (i32, i32) {
    %c0_i32 = arith.constant 0 : i32
    %c0_i32_0 = arith.constant 0 : i32
    %c0_i32_1 = arith.constant 0 : i32
    return %c0_i32, %c0_i32_0 : i32, i32
  }
  func.func @transform_2(%arg0: i32, %arg1: memref<1x2xi32, #tpu.memory_space<smem>>) -> (i32, i32, i32) {
    %c0_i32 = arith.constant 0 : i32
    %c0_i32_0 = arith.constant 0 : i32
    %c0_i32_1 = arith.constant 0 : i32
    %c0_i32_2 = arith.constant 0 : i32
    return %c0_i32, %c0_i32_0, %c0_i32_1 : i32, i32, i32
  }
  func.func @transform_3(%arg0: i32, %arg1: memref<1x2xi32, #tpu.memory_space<smem>>) -> (i32, i32) {
    %c0_i32 = arith.constant 0 : i32
    %c0_i32_0 = arith.constant 0 : i32
    %c0_i32_1 = arith.constant 0 : i32
    return %c0_i32, %c0_i32_0 : i32, i32
  }
  func.func @transform_4(%arg0: i32, %arg1: memref<1x2xi32, #tpu.memory_space<smem>>) -> (i32, i32) {
    %c0_i32 = arith.constant 0 : i32
    %c0_i32_0 = arith.constant 0 : i32
    %c0_i32_1 = arith.constant 0 : i32
    return %c0_i32, %c0_i32_0 : i32, i32
  }
  func.func @transform_5(%arg0: i32, %arg1: memref<1x2xi32, #tpu.memory_space<smem>>) -> (i32, i32) {
    %c0_i32 = arith.constant 0 : i32
    %c0_i32_0 = arith.constant 0 : i32
    %c0_i32_1 = arith.constant 0 : i32
    return %c0_i32, %c0_i32_0 : i32, i32
  }
  func.func @transform_6(%arg0: i32, %arg1: memref<1x2xi32, #tpu.memory_space<smem>>) -> (i32, i32) {
    %c0_i32 = arith.constant 0 : i32
    %c0_i32_0 = arith.constant 0 : i32
    %c0_i32_1 = arith.constant 0 : i32
    return %c0_i32, %c0_i32_0 : i32, i32
  }
  func.func @transform_7(%arg0: i32, %arg1: memref<1x2xi32, #tpu.memory_space<smem>>) -> (i32, i32) {
    %c0_i32 = arith.constant 0 : i32
    %c0_i32_0 = arith.constant 0 : i32
    %c0_i32_1 = arith.constant 0 : i32
    return %c0_i32, %c0_i32_0 : i32, i32
  }
  func.func @transform_8(%arg0: i32, %arg1: memref<1x2xi32, #tpu.memory_space<smem>>) -> (i32, i32) {
    %c0_i32 = arith.constant 0 : i32
    %c0_i32_0 = arith.constant 0 : i32
    %c0_i32_1 = arith.constant 0 : i32
    return %c0_i32, %c0_i32_0 : i32, i32
  }
  func.func @transform_9(%arg0: i32, %arg1: memref<1x2xi32, #tpu.memory_space<smem>>) -> (i32, i32) {
    %c0_i32 = arith.constant 0 : i32
    %c0_i32_0 = arith.constant 0 : i32
    %c0_i32_1 = arith.constant 0 : i32
    return %c0_i32, %c0_i32_0 : i32, i32
  }
  func.func @transform_10(%arg0: i32, %arg1: memref<1x2xi32, #tpu.memory_space<smem>>) -> (i32, i32) {
    %c0_i32 = arith.constant 0 : i32
    %c0_i32_0 = arith.constant 0 : i32
    %c0_i32_1 = arith.constant 0 : i32
    return %c0_i32, %c0_i32_0 : i32, i32
  }
  func.func @transform_11(%arg0: i32, %arg1: memref<1x2xi32, #tpu.memory_space<smem>>) -> (i32, i32) {
    %c0_i32 = arith.constant 0 : i32
    %c0_i32_0 = arith.constant 0 : i32
    %c0_i32_1 = arith.constant 0 : i32
    return %c0_i32, %c0_i32_0 : i32, i32
  }
  func.func @transform_12(%arg0: i32, %arg1: memref<1x2xi32, #tpu.memory_space<smem>>) -> (i32, i32, i32) {
    %c0_i32 = arith.constant 0 : i32
    %c0_i32_0 = arith.constant 0 : i32
    %c0_i32_1 = arith.constant 0 : i32
    return %arg0, %c0_i32, %c0_i32_0 : i32, i32, i32
  }
}

</mosaic_0001>

<llo_original>
// kernel: tpu_custom_call.1
$region0: #{tpu_custom_call.1}
  #allocation0 [shape = 'u32[]', space=smem, size = 0x4, offset = 0x4, fixed_abs, tag = 'smem constant byte address 0x4 - core index']
  #allocation1 [shape = 'u32[144,128]{1,0:T(1,128)}', space=vmem, size = 0x12000, scoped, tag = 'internal scratch']
  #allocation2 [shape = 'f32[2,128]{1,0:T(2,128)}', space=vmem, size = 0x400, scoped, tag = 'scratch operand']
  #allocation3 [shape = 's32[1]{0}', space=sflag, size = 0x4, scoped, tag = 'scoped memory for tpu_custom_call.1']
  #allocation4 [shape = 'u8[512]{0}', space=smem, size = 0x200, scoped, tag = 'prefetched SMEM operand 0']
  %s0 = inlined_call_operand.hbm [shape: s32[1,2], index: 0, kind: input, shape index: {}]
  %s1 = inlined_call_operand.hbm [shape: f32[20,128], index: 1, kind: input, shape index: {}]
  %s2 = inlined_call_operand.hbm [shape: f32[2,128], index: 2, kind: input, shape index: {}]
  %s3 = inlined_call_operand.hbm [shape: f32[2,8,128], index: 3, kind: input, shape index: {}]
  %s4 = inlined_call_operand.hbm [shape: bf16[128,256], index: 4, kind: input, shape index: {}]
  %s5 = inlined_call_operand.vmem [shape: f32[1,256], index: 5, kind: input, shape index: {}]
  %s6 = inlined_call_operand.hbm [shape: bf16[128,512], index: 6, kind: input, shape index: {}]
  %s7 = inlined_call_operand.vmem [shape: f32[1,512], index: 7, kind: input, shape index: {}]
  %s8 = inlined_call_operand.hbm [shape: bf16[128,128], index: 8, kind: input, shape index: {}]
  %s9 = inlined_call_operand.hbm [shape: bf16[128,384], index: 9, kind: input, shape index: {}]
  %s10 = inlined_call_operand.vmem [shape: f32[1,384], index: 10, kind: input, shape index: {}]
  %s11 = inlined_call_operand.hbm [shape: bf16[128,128], index: 11, kind: input, shape index: {}]
  %s12 = inlined_call_operand.vmem [shape: f32[1,128], index: 12, kind: input, shape index: {}]
  %s13 = inlined_call_operand.hbm [shape: f32[1,2,384], index: 13, kind: output, shape index: {}]
  %s14 = sld [smem:[#allocation0]]
  $region94: #{tpu_custom_call.1} parent=0
    _
  %s16 = ssub.s32 1, %s14
  %s17 = scalar_select 0, %s16, %s14
  %19 = dma.hbm_to_smem %s0, 16, [#allocation4], [#allocation3]
  %20 = dma.done [#allocation3], 16
  %21 = sfence
  $region1: #{tpu_custom_call.1} parent=0
    #allocation5 [shape = 'u8[12288]{0}', space=vmem, size = 0x3000, scoped, tag = 'input window, operand 1, single buffered']
    #allocation6 [shape = 's32[1]{0}', space=sflag, size = 0x4, scoped, tag = 'scoped memory for tpu_custom_call.1']
    #allocation7 [shape = 's32[1]{0}', space=sflag, size = 0x4, scoped, tag = 'scoped memory for tpu_custom_call.1']
    #allocation8 [shape = 'u8[1024]{0}', space=vmem, size = 0x400, scoped, tag = 'input window, operand 2, single buffered']
    #allocation9 [shape = 's32[1]{0}', space=sflag, size = 0x4, scoped, tag = 'scoped memory for tpu_custom_call.1']
    #allocation10 [shape = 'u8[8192]{0}', space=vmem, size = 0x2000, scoped, tag = 'input window, operand 3, single buffered']
    #allocation11 [shape = 'u8[65536]{0}', space=vmem, size = 0x10000, scoped, tag = 'input window, operand 4, single buffered']
    #allocation12 [shape = 's32[1]{0}', space=sflag, size = 0x4, scoped, tag = 'scoped memory for tpu_custom_call.1']
    #allocation13 [shape = 'u8[131072]{0}', space=vmem, size = 0x20000, scoped, tag = 'input window, operand 6, single buffered']
    #allocation14 [shape = 'u8[32768]{0}', space=vmem, size = 0x8000, scoped, tag = 'input window, operand 8, single buffered']
    #allocation15 [shape = 's32[1]{0}', space=sflag, size = 0x4, scoped, tag = 'scoped memory for tpu_custom_call.1']
    #allocation16 [shape = 'u8[98304]{0}', space=vmem, size = 0x18000, scoped, tag = 'input window, operand 9, single buffered']
    #allocation17 [shape = 'u8[32768]{0}', space=vmem, size = 0x8000, scoped, tag = 'input window, operand 11, single buffered']
    #allocation18 [shape = 's32[1]{0}', space=sflag, size = 0x4, scoped, tag = 'scoped memory for tpu_custom_call.1']
    #allocation19 [shape = 'u8[3072]{0}', space=vmem, size = 0xc00, scoped, tag = 'output window, operand 0, single buffered']
    %22 = vsyncpa [#allocation6], 0
    %23 = vsyncpa [#allocation9], 0
    %24 = vsyncpa [#allocation12], 0
    %25 = vsyncpa [#allocation15], 0
    %26 = vsyncpa [#allocation18], 0
    %27 = vsyncpa [#allocation7], 0
    // Predicated region
    $region2: #{tpu_custom_call.1} parent=1 // pred_check
      _
    $region3: #{tpu_custom_call.1} parent=1 // pred_check_branch
      %29 = sbr.rel (0) target = $region5
    $region4: #{tpu_custom_call.1} parent=1 // pred_region
      %s31 = ssub.s32 384, 384
      %32 = vsyncadd [#allocation6], %s31
      %s33 = sshll.u32 [#allocation5], 4
      %s34 = int_to_ptr.vmem [resolvable:$true] %s33
      %39 = dma.hbm_to_vmem [thread:$0]  %s1, 384, %s34, [#allocation6], 128, 128, 8
    $region5: #{tpu_custom_call.1} parent=1 // pred_fallthru
      _
    // Predicated region
    $region6: #{tpu_custom_call.1} parent=1 // pred_check
      _
    $region7: #{tpu_custom_call.1} parent=1 // pred_check_branch
      %41 = sbr.rel (0) target = $region9
    $region8: #{tpu_custom_call.1} parent=1 // pred_region
      %s43 = ssub.s32 32, 32
      %44 = vsyncadd [#allocation9], %s43
      %s46 = sshll.u32 [#allocation8], 4
      %s47 = int_to_ptr.vmem [resolvable:$true] %s46
      %49 = dma.hbm_to_vmem [thread:$0]  %s2, 32, %s47, [#allocation9]
    $region9: #{tpu_custom_call.1} parent=1 // pred_fallthru
      _
    // Predicated region
    $region10: #{tpu_custom_call.1} parent=1 // pred_check
      _
    $region11: #{tpu_custom_call.1} parent=1 // pred_check_branch
      %51 = sbr.rel (0) target = $region13
    $region12: #{tpu_custom_call.1} parent=1 // pred_region
      %s53 = ssub.s32 256, 256
      %54 = vsyncadd [#allocation9], %s53
      %s55 = sshll.u32 [#allocation10], 4
      %s56 = int_to_ptr.vmem [resolvable:$true] %s55
      %61 = dma.hbm_to_vmem [thread:$0]  %s3, 256, %s56, [#allocation9], 128, 128, 8
    $region13: #{tpu_custom_call.1} parent=1 // pred_fallthru
      _
    // Predicated region
    $region14: #{tpu_custom_call.1} parent=1 // pred_check
      _
    $region15: #{tpu_custom_call.1} parent=1 // pred_check_branch
      %63 = sbr.rel (0) target = $region17
    $region16: #{tpu_custom_call.1} parent=1 // pred_region
      %s65 = ssub.s32 2048, 2048
      %66 = vsyncadd [#allocation12], %s65
      %s67 = sshll.u32 [#allocation11], 4
      %s68 = int_to_ptr.vmem [resolvable:$true] %s67
      %73 = dma.hbm_to_vmem [thread:$0]  %s4, 2048, %s68, [#allocation12], 128, 128, 8
    $region17: #{tpu_custom_call.1} parent=1 // pred_fallthru
      _
    // Predicated region
    $region18: #{tpu_custom_call.1} parent=1 // pred_check
      _
    $region19: #{tpu_custom_call.1} parent=1 // pred_check_branch
      %75 = sbr.rel (0) target = $region21
    $region20: #{tpu_custom_call.1} parent=1 // pred_region
      _
    $region21: #{tpu_custom_call.1} parent=1 // pred_fallthru
      _
    // Predicated region
    $region22: #{tpu_custom_call.1} parent=1 // pred_check
      _
    $region23: #{tpu_custom_call.1} parent=1 // pred_check_branch
      %77 = sbr.rel (0) target = $region25
    $region24: #{tpu_custom_call.1} parent=1 // pred_region
      %s79 = ssub.s32 4096, 4096
      %80 = vsyncadd [#allocation12], %s79
      %s81 = sshll.u32 [#allocation13], 4
      %s82 = int_to_ptr.vmem [resolvable:$true] %s81
      %87 = dma.hbm_to_vmem [thread:$0]  %s6, 4096, %s82, [#allocation12], 256, 256, 16
    $region25: #{tpu_custom_call.1} parent=1 // pred_fallthru
      _
    // Predicated region
    $region26: #{tpu_custom_call.1} parent=1 // pred_check
      _
    $region27: #{tpu_custom_call.1} parent=1 // pred_check_branch
      %89 = sbr.rel (0) target = $region29
    $region28: #{tpu_custom_call.1} parent=1 // pred_region
      _
    $region29: #{tpu_custom_call.1} parent=1 // pred_fallthru
      _
    // Predicated region
    $region30: #{tpu_custom_call.1} parent=1 // pred_check
      _
    $region31: #{tpu_custom_call.1} parent=1 // pred_check_branch
      %91 = sbr.rel (0) target = $region33
    $region32: #{tpu_custom_call.1} parent=1 // pred_region
      %s93 = ssub.s32 1024, 1024
      %94 = vsyncadd [#allocation15], %s93
      %s95 = sshll.u32 [#allocation14], 4
      %s96 = int_to_ptr.vmem [resolvable:$true] %s95
      %101 = dma.hbm_to_vmem [thread:$0]  %s8, 1024, %s96, [#allocation15], 64, 64, 4
    $region33: #{tpu_custom_call.1} parent=1 // pred_fallthru
      _
    // Predicated region
    $region34: #{tpu_custom_call.1} parent=1 // pred_check
      _
    $region35: #{tpu_custom_call.1} parent=1 // pred_check_branch
      %103 = sbr.rel (0) target = $region37
    $region36: #{tpu_custom_call.1} parent=1 // pred_region
      %s105 = ssub.s32 3072, 3072
      %106 = vsyncadd [#allocation15], %s105
      %s107 = sshll.u32 [#allocation16], 4
      %s108 = int_to_ptr.vmem [resolvable:$true] %s107
      %113 = dma.hbm_to_vmem [thread:$0]  %s9, 3072, %s108, [#allocation15], 192, 192, 12
    $region37: #{tpu_custom_call.1} parent=1 // pred_fallthru
      _
    // Predicated region
    $region38: #{tpu_custom_call.1} parent=1 // pred_check
      _
    $region39: #{tpu_custom_call.1} parent=1 // pred_check_branch
      %115 = sbr.rel (0) target = $region41
    $region40: #{tpu_custom_call.1} parent=1 // pred_region
      _
    $region41: #{tpu_custom_call.1} parent=1 // pred_fallthru
      _
    // Predicated region
    $region42: #{tpu_custom_call.1} parent=1 // pred_check
      _
    $region43: #{tpu_custom_call.1} parent=1 // pred_check_branch
      %117 = sbr.rel (0) target = $region45
    $region44: #{tpu_custom_call.1} parent=1 // pred_region
      %s119 = ssub.s32 1024, 1024
      %120 = vsyncadd [#allocation18], %s119
      %s121 = sshll.u32 [#allocation17], 4
      %s122 = int_to_ptr.vmem [resolvable:$true] %s121
      %127 = dma.hbm_to_vmem [thread:$0]  %s11, 1024, %s122, [#allocation18], 64, 64, 4
    $region45: #{tpu_custom_call.1} parent=1 // pred_fallthru
      _
    // Predicated region
    $region46: #{tpu_custom_call.1} parent=1 // pred_check
      _
    $region47: #{tpu_custom_call.1} parent=1 // pred_check_branch
      %129 = sbr.rel (0) target = $region49
    $region48: #{tpu_custom_call.1} parent=1 // pred_region
      _
    $region49: #{tpu_custom_call.1} parent=1 // pred_fallthru
      _
    // Predicated region
    $region50: #{tpu_custom_call.1} parent=1 // pred_check
      _
    $region51: #{tpu_custom_call.1} parent=1 // pred_check_branch
      %131 = sbr.rel (0) target = $region53
    $region52: #{tpu_custom_call.1} parent=1 // pred_region
      %132 = dma.done [#allocation6], 384
    $region53: #{tpu_custom_call.1} parent=1 // pred_fallthru
      _
    // Predicated region
    $region54: #{tpu_custom_call.1} parent=1 // pred_check
      _
    $region55: #{tpu_custom_call.1} parent=1 // pred_check_branch
      %134 = sbr.rel (0) target = $region57
    $region56: #{tpu_custom_call.1} parent=1 // pred_region
      %135 = dma.done [#allocation9], 32
    $region57: #{tpu_custom_call.1} parent=1 // pred_fallthru
      _
    // Predicated region
    $region58: #{tpu_custom_call.1} parent=1 // pred_check
      _
    $region59: #{tpu_custom_call.1} parent=1 // pred_check_branch
      %137 = sbr.rel (0) target = $region61
    $region60: #{tpu_custom_call.1} parent=1 // pred_region
      %138 = dma.done [#allocation9], 256
    $region61: #{tpu_custom_call.1} parent=1 // pred_fallthru
      _
    // Predicated region
    $region62: #{tpu_custom_call.1} parent=1 // pred_check
      _
    $region63: #{tpu_custom_call.1} parent=1 // pred_check_branch
      %140 = sbr.rel (0) target = $region65
    $region64: #{tpu_custom_call.1} parent=1 // pred_region
      %141 = dma.done [#allocation12], 2048
    $region65: #{tpu_custom_call.1} parent=1 // pred_fallthru
      _
    // Predicated region
    $region66: #{tpu_custom_call.1} parent=1 // pred_check
      _
    $region67: #{tpu_custom_call.1} parent=1 // pred_check_branch
      %143 = sbr.rel (0) target = $region69
    $region68: #{tpu_custom_call.1} parent=1 // pred_region
      %144 = dma.done [#allocation12], 4096
    $region69: #{tpu_custom_call.1} parent=1 // pred_fallthru
      _
    // Predicated region
    $region70: #{tpu_custom_call.1} parent=1 // pred_check
      _
    $region71: #{tpu_custom_call.1} parent=1 // pred_check_branch
      %146 = sbr.rel (0) target = $region73
    $region72: #{tpu_custom_call.1} parent=1 // pred_region
      %147 = dma.done [#allocation15], 1024
    $region73: #{tpu_custom_call.1} parent=1 // pred_fallthru
      _
    // Predicated region
    $region74: #{tpu_custom_call.1} parent=1 // pred_check
      _
    $region75: #{tpu_custom_call.1} parent=1 // pred_check_branch
      %149 = sbr.rel (0) target = $region77
    $region76: #{tpu_custom_call.1} parent=1 // pred_region
      %150 = dma.done [#allocation15], 3072
    $region77: #{tpu_custom_call.1} parent=1 // pred_fallthru
      _
    // Predicated region
    $region78: #{tpu_custom_call.1} parent=1 // pred_check
      _
    $region79: #{tpu_custom_call.1} parent=1 // pred_check_branch
      %152 = sbr.rel (0) target = $region81
    $region80: #{tpu_custom_call.1} parent=1 // pred_region
      %153 = dma.done [#allocation18], 1024
    $region81: #{tpu_custom_call.1} parent=1 // pred_fallthru
      _
    %p155 = scmp.eq.s32.totalorder 0, 0
    // Predicated region
    $region82: #{tpu_custom_call.1} parent=1 // pred_check
      %p156 = pneg %p155
    $region83: #{tpu_custom_call.1} parent=1 // pred_check_branch
      %158 = sbr.rel (%p156) target = $region85
    $region84: #{tpu_custom_call.1} parent=1 // pred_region
      %v159 = vld [vmem:[#allocation8] sm:$0x3]
      %160 = vst [vmem:[#allocation2] sm:$0x3] %v159
    $region85: #{tpu_custom_call.1} parent=1 // pred_fallthru
      _
    %v161 = vld [vmem:[#allocation2] sm:$0x3]
    %s162 = smul.u32 0, 128
    %s163 = sld [smem:[#allocation4 + %s162]]
    %s164 = scalar_lea.vmem [#allocation5], %s163
    %v165 = vld [vmem:[%s164] sm:$0x1]
    %s166 = sadd.s32 %s162, 1
    %s167 = sld [smem:[#allocation4 + %s166]]
    %s168 = scalar_lea.vmem [#allocation5], %s167
    %v169 = vld [vmem:[%s168] sm:$0x1]
    %v171 = vrot.slane %v169, 7
    %vm173 = vcmask 1040384
    %v174 = vsel %vm173, %v165, %v171
    %v175 = vpack.c.bf16 %v174, %v174
    %v176 = vld [vmem:[#allocation11] sm:$0xff]
    %v177 = vld [vmem:[#allocation11 + $0x8] sm:$0xff]
    %v178 = vld [vmem:[#allocation11 + $0x10] sm:$0xff]
    %v179 = vld [vmem:[#allocation11 + $0x18] sm:$0xff]
    %v180 = vld [vmem:[#allocation11 + $0x20] sm:$0xff]
    %v181 = vld [vmem:[#allocation11 + $0x28] sm:$0xff]
    %v182 = vld [vmem:[#allocation11 + $0x30] sm:$0xff]
    %v183 = vld [vmem:[#allocation11 + $0x38] sm:$0xff]
    %v184 = vld [vmem:[#allocation11 + $0x40] sm:$0xff]
    %v185 = vld [vmem:[#allocation11 + $0x48] sm:$0xff]
    %v186 = vld [vmem:[#allocation11 + $0x50] sm:$0xff]
    %v187 = vld [vmem:[#allocation11 + $0x58] sm:$0xff]
    %v188 = vld [vmem:[#allocation11 + $0x60] sm:$0xff]
    %v189 = vld [vmem:[#allocation11 + $0x68] sm:$0xff]
    %v190 = vld [vmem:[#allocation11 + $0x70] sm:$0xff]
    %v191 = vld [vmem:[#allocation11 + $0x78] sm:$0xff]
    %v192 = vld [vmem:[%s5] sm:$0x3]
    %v194 = vlaneseq
    %v195 = vshrl.u32 %v194, 7
    %v196 = vsub.s32 0, %v195
    %v197 = vrot.slane %v192, %v196
    %v198 = vlaneseq
    %v199 = vshrl.u32 %v198, 7
    %v200 = vsub.s32 1, %v199
    %v201 = vrot.slane %v192, %v200
    %v220 = vunpack.c.l.b16 %v176
    %v221 = vunpack.c.h.b16 %v176
    %v222 = vunpack.c.l.b16 %v177
    %v223 = vunpack.c.h.b16 %v177
    %v224 = vunpack.c.l.b16 %v178
    %v225 = vunpack.c.h.b16 %v178
    %v226 = vunpack.c.l.b16 %v179
    %v227 = vunpack.c.h.b16 %v179
    %v228 = vunpack.c.l.b16 %v180
    %v229 = vunpack.c.h.b16 %v180
    %v230 = vunpack.c.l.b16 %v181
    %v231 = vunpack.c.h.b16 %v181
    %v232 = vunpack.c.l.b16 %v182
    %v233 = vunpack.c.h.b16 %v182
    %v234 = vunpack.c.l.b16 %v183
    %v235 = vunpack.c.h.b16 %v183
    %v236 = vunpack.c.l.b16 %v184
    %v237 = vunpack.c.h.b16 %v184
    %v238 = vunpack.c.l.b16 %v185
    %v239 = vunpack.c.h.b16 %v185
    %v240 = vunpack.c.l.b16 %v186
    %v241 = vunpack.c.h.b16 %v186
    %v242 = vunpack.c.l.b16 %v187
    %v243 = vunpack.c.h.b16 %v187
    %v244 = vunpack.c.l.b16 %v188
    %v245 = vunpack.c.h.b16 %v188
    %v246 = vunpack.c.l.b16 %v189
    %v247 = vunpack.c.h.b16 %v189
    %v248 = vunpack.c.l.b16 %v190
    %v249 = vunpack.c.h.b16 %v190
    %v250 = vunpack.c.l.b16 %v191
    %v251 = vunpack.c.h.b16 %v191
    %v252 = vpack.c.b16 %v222, %v220
    %v253 = vpack.c.b16 %v223, %v221
    %v254 = vpack.c.b16 %v226, %v224
    %v255 = vpack.c.b16 %v227, %v225
    %v256 = vpack.c.b16 %v230, %v228
    %v257 = vpack.c.b16 %v231, %v229
    %v258 = vpack.c.b16 %v234, %v232
    %v259 = vpack.c.b16 %v235, %v233
    %v260 = vpack.c.b16 %v238, %v236
    %v261 = vpack.c.b16 %v239, %v237
    %v262 = vpack.c.b16 %v242, %v240
    %v263 = vpack.c.b16 %v243, %v241
    %v264 = vpack.c.b16 %v246, %v244
    %v265 = vpack.c.b16 %v247, %v245
    %v266 = vpack.c.b16 %v250, %v248
    %v267 = vpack.c.b16 %v251, %v249
    %284 = vmatprep.subr.bf16.mxu0 %v253
    %285 = vmatpush1.bf16.msra.mxu0 %v252
    %286 = vmatprep.subr.bf16.mxu0 %v255
    %287 = vmatpush1.bf16.msra.mxu0 %v254
    %288 = vmatprep.subr.bf16.mxu0 %v257
    %289 = vmatpush1.bf16.msra.mxu0 %v256
    %290 = vmatprep.subr.bf16.mxu0 %v259
    %291 = vmatpush1.bf16.msra.mxu0 %v258
    %292 = vmatprep.subr.bf16.mxu0 %v261
    %293 = vmatpush1.bf16.msra.mxu0 %v260
    %294 = vmatprep.subr.bf16.mxu0 %v263
    %295 = vmatpush1.bf16.msra.mxu0 %v262
    %296 = vmatprep.subr.bf16.mxu0 %v265
    %297 = vmatpush1.bf16.msra.mxu0 %v264
    %298 = vmatprep.subr.bf16.mxu0 %v267
    %299 = vmatpush1.bf16.msra.mxu0 %v266
    %300 = vmatprep.subr.bf16.mxu0 0
    %301 = vmatpush1.bf16.msra.mxu0 0
    %302 = vmatprep.subr.bf16.mxu0 0
    %303 = vmatpush1.bf16.msra.mxu0 0
    %304 = vmatprep.subr.bf16.mxu0 0
    %305 = vmatpush1.bf16.msra.mxu0 0
    %306 = vmatprep.subr.bf16.mxu0 0
    %307 = vmatpush1.bf16.msra.mxu0 0
    %308 = vmatprep.subr.bf16.mxu0 0
    %309 = vmatpush1.bf16.msra.mxu0 0
    %310 = vmatprep.subr.bf16.mxu0 0
    %311 = vmatpush1.bf16.msra.mxu0 0
    %312 = vmatprep.subr.bf16.mxu0 0
    %313 = vmatpush1.bf16.msra.mxu0 0
    %314 = vmatprep.subr.bf16.mxu0 0
    %315 = vmatpush1.bf16.msra.mxu0 0
    %316 = vmatprep.mubr.bf16.mxu0 0
    %317 = vmatmul.mubr.bf16.gmra.mrb[0].mxu0 %v175
    %v318 = vpop.f32.mrb[0].mxu0
    %v319 = vadd.f32 %v197, %v318
    %v320 = vpop.f32.mrb[0].mxu0
    %v321 = vadd.f32 %v201, %v320
    %v322 = vpop.f32.mrb[0].mxu0
    %v323 = vpop.f32.mrb[0].mxu0
    %324 = vdwg.mxu0
    %v325 = vpack.c.bf16 %v161, %v161
    %v326 = vld [vmem:[#allocation13] sm:$0xff]
    %v327 = vld [vmem:[#allocation13 + $0x8] sm:$0xff]
    %v328 = vld [vmem:[#allocation13 + $0x10] sm:$0xff]
    %v329 = vld [vmem:[#allocation13 + $0x18] sm:$0xff]
    %v330 = vld [vmem:[#allocation13 + $0x20] sm:$0xff]
    %v331 = vld [vmem:[#allocation13 + $0x28] sm:$0xff]
    %v332 = vld [vmem:[#allocation13 + $0x30] sm:$0xff]
    %v333 = vld [vmem:[#allocation13 + $0x38] sm:$0xff]
    %v334 = vld [vmem:[#allocation13 + $0x40] sm:$0xff]
    %v335 = vld [vmem:[#allocation13 + $0x48] sm:$0xff]
    %v336 = vld [vmem:[#allocation13 + $0x50] sm:$0xff]
    %v337 = vld [vmem:[#allocation13 + $0x58] sm:$0xff]
    %v338 = vld [vmem:[#allocation13 + $0x60] sm:$0xff]
    %v339 = vld [vmem:[#allocation13 + $0x68] sm:$0xff]
    %v340 = vld [vmem:[#allocation13 + $0x70] sm:$0xff]
    %v341 = vld [vmem:[#allocation13 + $0x78] sm:$0xff]
    %v342 = vld [vmem:[#allocation13 + $0x80] sm:$0xff]
    %v343 = vld [vmem:[#allocation13 + $0x88] sm:$0xff]
    %v344 = vld [vmem:[#allocation13 + $0x90] sm:$0xff]
    %v345 = vld [vmem:[#allocation13 + $0x98] sm:$0xff]
    %v346 = vld [vmem:[#allocation13 + $0xa0] sm:$0xff]
    %v347 = vld [vmem:[#allocation13 + $0xa8] sm:$0xff]
    %v348 = vld [vmem:[#allocation13 + $0xb0] sm:$0xff]
    %v349 = vld [vmem:[#allocation13 + $0xb8] sm:$0xff]
    %v350 = vld [vmem:[#allocation13 + $0xc0] sm:$0xff]
    %v351 = vld [vmem:[#allocation13 + $0xc8] sm:$0xff]
    %v352 = vld [vmem:[#allocation13 + $0xd0] sm:$0xff]
    %v353 = vld [vmem:[#allocation13 + $0xd8] sm:$0xff]
    %v354 = vld [vmem:[#allocation13 + $0xe0] sm:$0xff]
    %v355 = vld [vmem:[#allocation13 + $0xe8] sm:$0xff]
    %v356 = vld [vmem:[#allocation13 + $0xf0] sm:$0xff]
    %v357 = vld [vmem:[#allocation13 + $0xf8] sm:$0xff]
    %v358 = vld [vmem:[%s7] sm:$0xf]
    %v360 = vlaneseq
    %v361 = vshrl.u32 %v360, 7
    %v362 = vsub.s32 0, %v361
    %v363 = vrot.slane %v358, %v362
    %v364 = vlaneseq
    %v365 = vshrl.u32 %v364, 7
    %v366 = vsub.s32 1, %v365
    %v367 = vrot.slane %v358, %v366
    %v368 = vlaneseq
    %v369 = vshrl.u32 %v368, 7
    %v370 = vsub.s32 2, %v369
    %v371 = vrot.slane %v358, %v370
    %v372 = vlaneseq
    %v373 = vshrl.u32 %v372, 7
    %v374 = vsub.s32 3, %v373
    %v375 = vrot.slane %v358, %v374
    %v412 = vunpack.c.l.b16 %v326
    %v413 = vunpack.c.h.b16 %v326
    %v414 = vunpack.c.l.b16 %v327
    %v415 = vunpack.c.h.b16 %v327
    %v416 = vunpack.c.l.b16 %v328
    %v417 = vunpack.c.h.b16 %v328
    %v418 = vunpack.c.l.b16 %v329
    %v419 = vunpack.c.h.b16 %v329
    %v420 = vunpack.c.l.b16 %v330
    %v421 = vunpack.c.h.b16 %v330
    %v422 = vunpack.c.l.b16 %v331
    %v423 = vunpack.c.h.b16 %v331
    %v424 = vunpack.c.l.b16 %v332
    %v425 = vunpack.c.h.b16 %v332
    %v426 = vunpack.c.l.b16 %v333
    %v427 = vunpack.c.h.b16 %v333
    %v428 = vunpack.c.l.b16 %v334
    %v429 = vunpack.c.h.b16 %v334
    %v430 = vunpack.c.l.b16 %v335
    %v431 = vunpack.c.h.b16 %v335
    %v432 = vunpack.c.l.b16 %v336
    %v433 = vunpack.c.h.b16 %v336
    %v434 = vunpack.c.l.b16 %v337
    %v435 = vunpack.c.h.b16 %v337
    %v436 = vunpack.c.l.b16 %v338
    %v437 = vunpack.c.h.b16 %v338
    %v438 = vunpack.c.l.b16 %v339
    %v439 = vunpack.c.h.b16 %v339
    %v440 = vunpack.c.l.b16 %v340
    %v441 = vunpack.c.h.b16 %v340
    %v442 = vunpack.c.l.b16 %v341
    %v443 = vunpack.c.h.b16 %v341
    %v444 = vunpack.c.l.b16 %v342
    %v445 = vunpack.c.h.b16 %v342
    %v446 = vunpack.c.l.b16 %v343
    %v447 = vunpack.c.h.b16 %v343
    %v448 = vunpack.c.l.b16 %v344
    %v449 = vunpack.c.h.b16 %v344
    %v450 = vunpack.c.l.b16 %v345
    %v451 = vunpack.c.h.b16 %v345
    %v452 = vunpack.c.l.b16 %v346
    %v453 = vunpack.c.h.b16 %v346
    %v454 = vunpack.c.l.b16 %v347
    %v455 = vunpack.c.h.b16 %v347
    %v456 = vunpack.c.l.b16 %v348
    %v457 = vunpack.c.h.b16 %v348
    %v458 = vunpack.c.l.b16 %v349
    %v459 = vunpack.c.h.b16 %v349
    %v460 = vunpack.c.l.b16 %v350
    %v461 = vunpack.c.h.b16 %v350
    %v462 = vunpack.c.l.b16 %v351
    %v463 = vunpack.c.h.b16 %v351
    %v464 = vunpack.c.l.b16 %v352
    %v465 = vunpack.c.h.b16 %v352
    %v466 = vunpack.c.l.b16 %v353
    %v467 = vunpack.c.h.b16 %v353
    %v468 = vunpack.c.l.b16 %v354
    %v469 = vunpack.c.h.b16 %v354
    %v470 = vunpack.c.l.b16 %v355
    %v471 = vunpack.c.h.b16 %v355
    %v472 = vunpack.c.l.b16 %v356
    %v473 = vunpack.c.h.b16 %v356
    %v474 = vunpack.c.l.b16 %v357
    %v475 = vunpack.c.h.b16 %v357
    %v476 = vpack.c.b16 %v416, %v412
    %v477 = vpack.c.b16 %v417, %v413
    %v478 = vpack.c.b16 %v418, %v414
    %v479 = vpack.c.b16 %v419, %v415
    %v480 = vpack.c.b16 %v424, %v420
    %v481 = vpack.c.b16 %v425, %v421
    %v482 = vpack.c.b16 %v426, %v422
    %v483 = vpack.c.b16 %v427, %v423
    %v484 = vpack.c.b16 %v432, %v428
    %v485 = vpack.c.b16 %v433, %v429
    %v486 = vpack.c.b16 %v434, %v430
    %v487 = vpack.c.b16 %v435, %v431
    %v488 = vpack.c.b16 %v440, %v436
    %v489 = vpack.c.b16 %v441, %v437
    %v490 = vpack.c.b16 %v442, %v438
    %v491 = vpack.c.b16 %v443, %v439
    %v492 = vpack.c.b16 %v448, %v444
    %v493 = vpack.c.b16 %v449, %v445
    %v494 = vpack.c.b16 %v450, %v446
    %v495 = vpack.c.b16 %v451, %v447
    %v496 = vpack.c.b16 %v456, %v452
    %v497 = vpack.c.b16 %v457, %v453
    %v498 = vpack.c.b16 %v458, %v454
    %v499 = vpack.c.b16 %v459, %v455
    %v500 = vpack.c.b16 %v464, %v460
    %v501 = vpack.c.b16 %v465, %v461
    %v502 = vpack.c.b16 %v466, %v462
    %v503 = vpack.c.b16 %v467, %v463
    %v504 = vpack.c.b16 %v472, %v468
    %v505 = vpack.c.b16 %v473, %v469
    %v506 = vpack.c.b16 %v474, %v470
    %v507 = vpack.c.b16 %v475, %v471
    %540 = vmatprep.subr.bf16.mxu0 %v477
    %541 = vmatpush1.bf16.msra.mxu0 %v476
    %542 = vmatprep.subr.bf16.mxu0 %v481
    %543 = vmatpush1.bf16.msra.mxu0 %v480
    %544 = vmatprep.subr.bf16.mxu0 %v485
    %545 = vmatpush1.bf16.msra.mxu0 %v484
    %546 = vmatprep.subr.bf16.mxu0 %v489
    %547 = vmatpush1.bf16.msra.mxu0 %v488
    %548 = vmatprep.subr.bf16.mxu0 %v493
    %549 = vmatpush1.bf16.msra.mxu0 %v492
    %550 = vmatprep.subr.bf16.mxu0 %v497
    %551 = vmatpush1.bf16.msra.mxu0 %v496
    %552 = vmatprep.subr.bf16.mxu0 %v501
    %553 = vmatpush1.bf16.msra.mxu0 %v500
    %554 = vmatprep.subr.bf16.mxu0 %v505
    %555 = vmatpush1.bf16.msra.mxu0 %v504
    %556 = vmatprep.subr.bf16.mxu0 0
    %557 = vmatpush1.bf16.msra.mxu0 0
    %558 = vmatprep.subr.bf16.mxu0 0
    %559 = vmatpush1.bf16.msra.mxu0 0
    %560 = vmatprep.subr.bf16.mxu0 0
    %561 = vmatpush1.bf16.msra.mxu0 0
    %562 = vmatprep.subr.bf16.mxu0 0
    %563 = vmatpush1.bf16.msra.mxu0 0
    %564 = vmatprep.subr.bf16.mxu0 0
    %565 = vmatpush1.bf16.msra.mxu0 0
    %566 = vmatprep.subr.bf16.mxu0 0
    %567 = vmatpush1.bf16.msra.mxu0 0
    %568 = vmatprep.subr.bf16.mxu0 0
    %569 = vmatpush1.bf16.msra.mxu0 0
    %570 = vmatprep.subr.bf16.mxu0 0
    %571 = vmatpush1.bf16.msra.mxu0 0
    %572 = vmatprep.mubr.bf16.mxu0 0
    %573 = vmatmul.mubr.bf16.gmra.mrb[0].mxu0 %v325
    %v574 = vpop.f32.mrb[0].mxu0
    %v575 = vadd.f32 %v363, %v574
    %v576 = vpop.f32.mrb[0].mxu0
    %v577 = vadd.f32 %v367, %v576
    %v578 = vpop.f32.mrb[0].mxu0
    %v579 = vpop.f32.mrb[0].mxu0
    %580 = vdwg.mxu0
    %581 = vmatprep.subr.bf16.mxu0 %v479
    %582 = vmatpush1.bf16.msra.mxu0 %v478
    %583 = vmatprep.subr.bf16.mxu0 %v483
    %584 = vmatpush1.bf16.msra.mxu0 %v482
    %585 = vmatprep.subr.bf16.mxu0 %v487
    %586 = vmatpush1.bf16.msra.mxu0 %v486
    %587 = vmatprep.subr.bf16.mxu0 %v491
    %588 = vmatpush1.bf16.msra.mxu0 %v490
    %589 = vmatprep.subr.bf16.mxu0 %v495
    %590 = vmatpush1.bf16.msra.mxu0 %v494
    %591 = vmatprep.subr.bf16.mxu0 %v499
    %592 = vmatpush1.bf16.msra.mxu0 %v498
    %593 = vmatprep.subr.bf16.mxu0 %v503
    %594 = vmatpush1.bf16.msra.mxu0 %v502
    %595 = vmatprep.subr.bf16.mxu0 %v507
    %596 = vmatpush1.bf16.msra.mxu0 %v506
    %597 = vmatprep.subr.bf16.mxu0 0
    %598 = vmatpush1.bf16.msra.mxu0 0
    %599 = vmatprep.subr.bf16.mxu0 0
    %600 = vmatpush1.bf16.msra.mxu0 0
    %601 = vmatprep.subr.bf16.mxu0 0
    %602 = vmatpush1.bf16.msra.mxu0 0
    %603 = vmatprep.subr.bf16.mxu0 0
    %604 = vmatpush1.bf16.msra.mxu0 0
    %605 = vmatprep.subr.bf16.mxu0 0
    %606 = vmatpush1.bf16.msra.mxu0 0
    %607 = vmatprep.subr.bf16.mxu0 0
    %608 = vmatpush1.bf16.msra.mxu0 0
    %609 = vmatprep.subr.bf16.mxu0 0
    %610 = vmatpush1.bf16.msra.mxu0 0
    %611 = vmatprep.subr.bf16.mxu0 0
    %612 = vmatpush1.bf16.msra.mxu0 0
    %613 = vmatprep.mubr.bf16.mxu0 0
    %614 = vmatmul.mubr.bf16.gmra.mrb[0].mxu0 %v325
    %v615 = vpop.f32.mrb[0].mxu0
    %v616 = vadd.f32 %v371, %v615
    %v617 = vpop.f32.mrb[0].mxu0
    %v618 = vadd.f32 %v375, %v617
    %v619 = vpop.f32.mrb[0].mxu0
    %v620 = vpop.f32.mrb[0].mxu0
    %621 = vdwg.mxu0
    %v622 = vadd.f32 %v319, %v575
    %vm623 = vcmask 1041408
    %v624 = vsel %vm623, %v622, -inf
    %625 = vmax.xlane.f32.xlu0 %v624
    %v626 = vpop.xlane.xlu0 %625
    %v627 = vsub.f32 %v622, %v626
    %v628 = vmul.f32 %v627, 1.442695
    %v629 = vpow.pop %v628
    %v630 = vsel %vm623, %v629, 0.0
    %631 = vadd.xlane.f32.xlu0 %v630
    %v632 = vpop.xlane.xlu0 %631
    %v633 = vrcp.pop %v632
    %v634 = vmul.f32 %v629, %v633
    %635 = vst [vmem:[#allocation19] sm:$0x3] %v634
    %v636 = vld [vmem:[#allocation10] sm:$0xff]
    %vm637 = vcmask 64512
    %v639 = vsel %vm637, %v634, 0
    %641 = vmatprep.subr.mxu0 0.0
    %642 = vmatpush1.msra.mxu0 %v636
    %643 = vmatprep.subr.mxu0 0.0
    %644 = vmatpush1.msra.mxu0 0.0
    %645 = vmatprep.subr.mxu0 0.0
    %646 = vmatpush1.msra.mxu0 0.0
    %647 = vmatprep.subr.mxu0 0.0
    %648 = vmatpush1.msra.mxu0 0.0
    %649 = vmatprep.subr.mxu0 0.0
    %650 = vmatpush1.msra.mxu0 0.0
    %651 = vmatprep.subr.mxu0 0.0
    %652 = vmatpush1.msra.mxu0 0.0
    %653 = vmatprep.subr.mxu0 0.0
    %654 = vmatpush1.msra.mxu0 0.0
    %655 = vmatprep.subr.mxu0 0.0
    %656 = vmatpush1.msra.mxu0 0.0
    %657 = vmatprep.subr.mxu0 0.0
    %658 = vmatpush1.msra.mxu0 0.0
    %659 = vmatprep.subr.mxu0 0.0
    %660 = vmatpush1.msra.mxu0 0.0
    %661 = vmatprep.subr.mxu0 0.0
    %662 = vmatpush1.msra.mxu0 0.0
    %663 = vmatprep.subr.mxu0 0.0
    %664 = vmatpush1.msra.mxu0 0.0
    %665 = vmatprep.subr.mxu0 0.0
    %666 = vmatpush1.msra.mxu0 0.0
    %667 = vmatprep.subr.mxu0 0.0
    %668 = vmatpush1.msra.mxu0 0.0
    %669 = vmatprep.subr.mxu0 0.0
    %670 = vmatpush1.msra.mxu0 0.0
    %671 = vmatprep.subr.mxu0 0.0
    %672 = vmatpush1.msra.mxu0 0.0
    %673 = vmatprep.subr.mxu0 0.0
    %674 = vmatpush1.msra.mxu0 0.0
    %675 = vmatprep.subr.mxu0 0.0
    %676 = vmatpush1.msra.mxu0 0.0
    %677 = vmatprep.subr.mxu0 0.0
    %678 = vmatpush1.msra.mxu0 0.0
    %679 = vmatprep.subr.mxu0 0.0
    %680 = vmatpush1.msra.mxu0 0.0
    %681 = vmatprep.subr.mxu0 0.0
    %682 = vmatpush1.msra.mxu0 0.0
    %683 = vmatprep.subr.mxu0 0.0
    %684 = vmatpush1.msra.mxu0 0.0
    %685 = vmatprep.subr.mxu0 0.0
    %686 = vmatpush1.msra.mxu0 0.0
    %687 = vmatprep.subr.mxu0 0.0
    %688 = vmatpush1.msra.mxu0 0.0
    %689 = vmatprep.subr.mxu0 0.0
    %690 = vmatpush1.msra.mxu0 0.0
    %691 = vmatprep.subr.mxu0 0.0
    %692 = vmatpush1.msra.mxu0 0.0
    %693 = vmatprep.subr.mxu0 0.0
    %694 = vmatpush1.msra.mxu0 0.0
    %695 = vmatprep.subr.mxu0 0.0
    %696 = vmatpush1.msra.mxu0 0.0
    %697 = vmatprep.subr.mxu0 0.0
    %698 = vmatpush1.msra.mxu0 0.0
    %699 = vmatprep.subr.mxu0 0.0
    %700 = vmatpush1.msra.mxu0 0.0
    %701 = vmatprep.subr.mxu0 0.0
    %702 = vmatpush1.msra.mxu0 0.0
    %703 = vmatprep.subr.mxu0 0.0
    %704 = vmatpush1.msra.mxu0 0.0
    %705 = vmatprep.mubr.f32.mxu0 0.0
    %706 = vmatmul.mubr.f32.gmra.mrb[0].mxu0 %v639
    %v707 = vpop.f32.mrb[0].mxu0
    %v708 = vadd.f32 0.0, %v707
    %v709 = vpop.f32.mrb[0].mxu0
    %710 = vdwg.mxu0
    %s711 = scalar_lea.vmem [#allocation10], 8
    %v712 = vld [vmem:[%s711] sm:$0xff]
    %v713 = vrot.slane %v634, 1
    %v714 = vsel %vm637, %v713, 0
    %716 = vmatprep.subr.mxu0 0.0
    %717 = vmatpush1.msra.mxu0 %v712
    %718 = vmatprep.subr.mxu0 0.0
    %719 = vmatpush1.msra.mxu0 0.0
    %720 = vmatprep.subr.mxu0 0.0
    %721 = vmatpush1.msra.mxu0 0.0
    %722 = vmatprep.subr.mxu0 0.0
    %723 = vmatpush1.msra.mxu0 0.0
    %724 = vmatprep.subr.mxu0 0.0
    %725 = vmatpush1.msra.mxu0 0.0
    %726 = vmatprep.subr.mxu0 0.0
    %727 = vmatpush1.msra.mxu0 0.0
    %728 = vmatprep.subr.mxu0 0.0
    %729 = vmatpush1.msra.mxu0 0.0
    %730 = vmatprep.subr.mxu0 0.0
    %731 = vmatpush1.msra.mxu0 0.0
    %732 = vmatprep.subr.mxu0 0.0
    %733 = vmatpush1.msra.mxu0 0.0
    %734 = vmatprep.subr.mxu0 0.0
    %735 = vmatpush1.msra.mxu0 0.0
    %736 = vmatprep.subr.mxu0 0.0
    %737 = vmatpush1.msra.mxu0 0.0
    %738 = vmatprep.subr.mxu0 0.0
    %739 = vmatpush1.msra.mxu0 0.0
    %740 = vmatprep.subr.mxu0 0.0
    %741 = vmatpush1.msra.mxu0 0.0
    %742 = vmatprep.subr.mxu0 0.0
    %743 = vmatpush1.msra.mxu0 0.0
    %744 = vmatprep.subr.mxu0 0.0
    %745 = vmatpush1.msra.mxu0 0.0
    %746 = vmatprep.subr.mxu0 0.0
    %747 = vmatpush1.msra.mxu0 0.0
    %748 = vmatprep.subr.mxu0 0.0
    %749 = vmatpush1.msra.mxu0 0.0
    %750 = vmatprep.subr.mxu0 0.0
    %751 = vmatpush1.msra.mxu0 0.0
    %752 = vmatprep.subr.mxu0 0.0
    %753 = vmatpush1.msra.mxu0 0.0
    %754 = vmatprep.subr.mxu0 0.0
    %755 = vmatpush1.msra.mxu0 0.0
    %756 = vmatprep.subr.mxu0 0.0
    %757 = vmatpush1.msra.mxu0 0.0
    %758 = vmatprep.subr.mxu0 0.0
    %759 = vmatpush1.msra.mxu0 0.0
    %760 = vmatprep.subr.mxu0 0.0
    %761 = vmatpush1.msra.mxu0 0.0
    %762 = vmatprep.subr.mxu0 0.0
    %763 = vmatpush1.msra.mxu0 0.0
    %764 = vmatprep.subr.mxu0 0.0
    %765 = vmatpush1.msra.mxu0 0.0
    %766 = vmatprep.subr.mxu0 0.0
    %767 = vmatpush1.msra.mxu0 0.0
    %768 = vmatprep.subr.mxu0 0.0
    %769 = vmatpush1.msra.mxu0 0.0
    %770 = vmatprep.subr.mxu0 0.0
    %771 = vmatpush1.msra.mxu0 0.0
    %772 = vmatprep.subr.mxu0 0.0
    %773 = vmatpush1.msra.mxu0 0.0
    %774 = vmatprep.subr.mxu0 0.0
    %775 = vmatpush1.msra.mxu0 0.0
    %776 = vmatprep.subr.mxu0 0.0
    %777 = vmatpush1.msra.mxu0 0.0
    %778 = vmatprep.subr.mxu0 0.0
    %779 = vmatpush1.msra.mxu0 0.0
    %780 = vmatprep.mubr.f32.mxu0 0.0
    %781 = vmatmul.mubr.f32.gmra.mrb[0].mxu0 %v714
    %v782 = vpop.f32.mrb[0].mxu0
    %v783 = vadd.f32 0.0, %v782
    %v784 = vpop.f32.mrb[0].mxu0
    %785 = vdwg.mxu0
    %v787 = vrot.slane %v783, 7
    %v789 = vsel %vm173, %v708, %v787
    %v790 = vpack.c.bf16 %v789, %v789
    %v791 = vld [vmem:[#allocation14] sm:$0xf]
    %v792 = vld [vmem:[#allocation14 + $0x4] sm:$0xf]
    %v793 = vld [vmem:[#allocation14 + $0x8] sm:$0xf]
    %v794 = vld [vmem:[#allocation14 + $0xc] sm:$0xf]
    %v795 = vld [vmem:[#allocation14 + $0x10] sm:$0xf]
    %v796 = vld [vmem:[#allocation14 + $0x14] sm:$0xf]
    %v797 = vld [vmem:[#allocation14 + $0x18] sm:$0xf]
    %v798 = vld [vmem:[#allocation14 + $0x1c] sm:$0xf]
    %v799 = vld [vmem:[#allocation14 + $0x20] sm:$0xf]
    %v800 = vld [vmem:[#allocation14 + $0x24] sm:$0xf]
    %v801 = vld [vmem:[#allocation14 + $0x28] sm:$0xf]
    %v802 = vld [vmem:[#allocation14 + $0x2c] sm:$0xf]
    %v803 = vld [vmem:[#allocation14 + $0x30] sm:$0xf]
    %v804 = vld [vmem:[#allocation14 + $0x34] sm:$0xf]
    %v805 = vld [vmem:[#allocation14 + $0x38] sm:$0xf]
    %v806 = vld [vmem:[#allocation14 + $0x3c] sm:$0xf]
    %v823 = vunpack.c.l.b16 %v791
    %v824 = vunpack.c.l.b16 %v792
    %v825 = vunpack.c.l.b16 %v793
    %v826 = vunpack.c.l.b16 %v794
    %v827 = vunpack.c.l.b16 %v795
    %v828 = vunpack.c.l.b16 %v796
    %v829 = vunpack.c.l.b16 %v797
    %v830 = vunpack.c.l.b16 %v798
    %v831 = vunpack.c.l.b16 %v799
    %v832 = vunpack.c.l.b16 %v800
    %v833 = vunpack.c.l.b16 %v801
    %v834 = vunpack.c.l.b16 %v802
    %v835 = vunpack.c.l.b16 %v803
    %v836 = vunpack.c.l.b16 %v804
    %v837 = vunpack.c.l.b16 %v805
    %v838 = vunpack.c.l.b16 %v806
    %v839 = vpack.c.b16 %v824, %v823
    %v840 = vpack.c.b16 %v826, %v825
    %v841 = vpack.c.b16 %v828, %v827
    %v842 = vpack.c.b16 %v830, %v829
    %v843 = vpack.c.b16 %v832, %v831
    %v844 = vpack.c.b16 %v834, %v833
    %v845 = vpack.c.b16 %v836, %v835
    %v846 = vpack.c.b16 %v838, %v837
    %855 = vmatprep.subr.bf16.mxu0 0
    %856 = vmatpush1.bf16.msra.mxu0 %v839
    %857 = vmatprep.subr.bf16.mxu0 0
    %858 = vmatpush1.bf16.msra.mxu0 %v840
    %859 = vmatprep.subr.bf16.mxu0 0
    %860 = vmatpush1.bf16.msra.mxu0 %v841
    %861 = vmatprep.subr.bf16.mxu0 0
    %862 = vmatpush1.bf16.msra.mxu0 %v842
    %863 = vmatprep.subr.bf16.mxu0 0
    %864 = vmatpush1.bf16.msra.mxu0 %v843
    %865 = vmatprep.subr.bf16.mxu0 0
    %866 = vmatpush1.bf16.msra.mxu0 %v844
    %867 = vmatprep.subr.bf16.mxu0 0
    %868 = vmatpush1.bf16.msra.mxu0 %v845
    %869 = vmatprep.subr.bf16.mxu0 0
    %870 = vmatpush1.bf16.msra.mxu0 %v846
    %871 = vmatprep.subr.bf16.mxu0 0
    %872 = vmatpush1.bf16.msra.mxu0 0
    %873 = vmatprep.subr.bf16.mxu0 0
    %874 = vmatpush1.bf16.msra.mxu0 0
    %875 = vmatprep.subr.bf16.mxu0 0
    %876 = vmatpush1.bf16.msra.mxu0 0
    %877 = vmatprep.subr.bf16.mxu0 0
    %878 = vmatpush1.bf16.msra.mxu0 0
    %879 = vmatprep.subr.bf16.mxu0 0
    %880 = vmatpush1.bf16.msra.mxu0 0
    %881 = vmatprep.subr.bf16.mxu0 0
    %882 = vmatpush1.bf16.msra.mxu0 0
    %883 = vmatprep.subr.bf16.mxu0 0
    %884 = vmatpush1.bf16.msra.mxu0 0
    %885 = vmatprep.subr.bf16.mxu0 0
    %886 = vmatpush1.bf16.msra.mxu0 0
    %887 = vmatprep.mubr.bf16.mxu0 0
    %888 = vmatmul.mubr.bf16.gmra.mrb[0].mxu0 %v790
    %v889 = vpop.f32.mrb[0].mxu0
    %v890 = vadd.f32 0.0, %v889
    %v891 = vpop.f32.mrb[0].mxu0
    %v892 = vpop.f32.mrb[0].mxu0
    %v893 = vpop.f32.mrb[0].mxu0
    %894 = vdwg.mxu0
    %v895 = vadd.f32 %v321, %v890
    %v896 = vmax.f32 %v895, 0.0
    %v897 = vpack.c.bf16 %v896, %v896
    %v898 = vld [vmem:[#allocation16] sm:$0xff]
    %v899 = vld [vmem:[#allocation16 + $0x8] sm:$0xf]
    %v900 = vld [vmem:[#allocation16 + $0xc] sm:$0xff]
    %v901 = vld [vmem:[#allocation16 + $0x14] sm:$0xf]
    %v902 = vld [vmem:[#allocation16 + $0x18] sm:$0xff]
    %v903 = vld [vmem:[#allocation16 + $0x20] sm:$0xf]
    %v904 = vld [vmem:[#allocation16 + $0x24] sm:$0xff]
    %v905 = vld [vmem:[#allocation16 + $0x2c] sm:$0xf]
    %v906 = vld [vmem:[#allocation16 + $0x30] sm:$0xff]
    %v907 = vld [vmem:[#allocation16 + $0x38] sm:$0xf]
    %v908 = vld [vmem:[#allocation16 + $0x3c] sm:$0xff]
    %v909 = vld [vmem:[#allocation16 + $0x44] sm:$0xf]
    %v910 = vld [vmem:[#allocation16 + $0x48] sm:$0xff]
    %v911 = vld [vmem:[#allocation16 + $0x50] sm:$0xf]
    %v912 = vld [vmem:[#allocation16 + $0x54] sm:$0xff]
    %v913 = vld [vmem:[#allocation16 + $0x5c] sm:$0xf]
    %v914 = vld [vmem:[#allocation16 + $0x60] sm:$0xff]
    %v915 = vld [vmem:[#allocation16 + $0x68] sm:$0xf]
    %v916 = vld [vmem:[#allocation16 + $0x6c] sm:$0xff]
    %v917 = vld [vmem:[#allocation16 + $0x74] sm:$0xf]
    %v918 = vld [vmem:[#allocation16 + $0x78] sm:$0xff]
    %v919 = vld [vmem:[#allocation16 + $0x80] sm:$0xf]
    %v920 = vld [vmem:[#allocation16 + $0x84] sm:$0xff]
    %v921 = vld [vmem:[#allocation16 + $0x8c] sm:$0xf]
    %v922 = vld [vmem:[#allocation16 + $0x90] sm:$0xff]
    %v923 = vld [vmem:[#allocation16 + $0x98] sm:$0xf]
    %v924 = vld [vmem:[#allocation16 + $0x9c] sm:$0xff]
    %v925 = vld [vmem:[#allocation16 + $0xa4] sm:$0xf]
    %v926 = vld [vmem:[#allocation16 + $0xa8] sm:$0xff]
    %v927 = vld [vmem:[#allocation16 + $0xb0] sm:$0xf]
    %v928 = vld [vmem:[#allocation16 + $0xb4] sm:$0xff]
    %v929 = vld [vmem:[#allocation16 + $0xbc] sm:$0xf]
    %v930 = vld [vmem:[%s10] sm:$0x7]
    %v932 = vlaneseq
    %v933 = vshrl.u32 %v932, 7
    %v934 = vsub.s32 0, %v933
    %v935 = vrot.slane %v930, %v934
    %v936 = vlaneseq
    %v937 = vshrl.u32 %v936, 7
    %v938 = vsub.s32 1, %v937
    %v939 = vrot.slane %v930, %v938
    %v940 = vlaneseq
    %v941 = vshrl.u32 %v940, 7
    %v942 = vsub.s32 2, %v941
    %v943 = vrot.slane %v930, %v942
    %v979 = vunpack.c.l.b16 %v898
    %v980 = vunpack.c.h.b16 %v898
    %v981 = vunpack.c.l.b16 %v899
    %v982 = vunpack.c.l.b16 %v900
    %v983 = vunpack.c.h.b16 %v900
    %v984 = vunpack.c.l.b16 %v901
    %v985 = vunpack.c.l.b16 %v902
    %v986 = vunpack.c.h.b16 %v902
    %v987 = vunpack.c.l.b16 %v903
    %v988 = vunpack.c.l.b16 %v904
    %v989 = vunpack.c.h.b16 %v904
    %v990 = vunpack.c.l.b16 %v905
    %v991 = vunpack.c.l.b16 %v906
    %v992 = vunpack.c.h.b16 %v906
    %v993 = vunpack.c.l.b16 %v907
    %v994 = vunpack.c.l.b16 %v908
    %v995 = vunpack.c.h.b16 %v908
    %v996 = vunpack.c.l.b16 %v909
    %v997 = vunpack.c.l.b16 %v910
    %v998 = vunpack.c.h.b16 %v910
    %v999 = vunpack.c.l.b16 %v911
    %v1000 = vunpack.c.l.b16 %v912
    %v1001 = vunpack.c.h.b16 %v912
    %v1002 = vunpack.c.l.b16 %v913
    %v1003 = vunpack.c.l.b16 %v914
    %v1004 = vunpack.c.h.b16 %v914
    %v1005 = vunpack.c.l.b16 %v915
    %v1006 = vunpack.c.l.b16 %v916
    %v1007 = vunpack.c.h.b16 %v916
    %v1008 = vunpack.c.l.b16 %v917
    %v1009 = vunpack.c.l.b16 %v918
    %v1010 = vunpack.c.h.b16 %v918
    %v1011 = vunpack.c.l.b16 %v919
    %v1012 = vunpack.c.l.b16 %v920
    %v1013 = vunpack.c.h.b16 %v920
    %v1014 = vunpack.c.l.b16 %v921
    %v1015 = vunpack.c.l.b16 %v922
    %v1016 = vunpack.c.h.b16 %v922
    %v1017 = vunpack.c.l.b16 %v923
    %v1018 = vunpack.c.l.b16 %v924
    %v1019 = vunpack.c.h.b16 %v924
    %v1020 = vunpack.c.l.b16 %v925
    %v1021 = vunpack.c.l.b16 %v926
    %v1022 = vunpack.c.h.b16 %v926
    %v1023 = vunpack.c.l.b16 %v927
    %v1024 = vunpack.c.l.b16 %v928
    %v1025 = vunpack.c.h.b16 %v928
    %v1026 = vunpack.c.l.b16 %v929
    %v1027 = vpack.c.b16 %v982, %v979
    %v1028 = vpack.c.b16 %v983, %v980
    %v1029 = vpack.c.b16 %v984, %v981
    %v1030 = vpack.c.b16 %v988, %v985
    %v1031 = vpack.c.b16 %v989, %v986
    %v1032 = vpack.c.b16 %v990, %v987
    %v1033 = vpack.c.b16 %v994, %v991
    %v1034 = vpack.c.b16 %v995, %v992
    %v1035 = vpack.c.b16 %v996, %v993
    %v1036 = vpack.c.b16 %v1000, %v997
    %v1037 = vpack.c.b16 %v1001, %v998
    %v1038 = vpack.c.b16 %v1002, %v999
    %v1039 = vpack.c.b16 %v1006, %v1003
    %v1040 = vpack.c.b16 %v1007, %v1004
    %v1041 = vpack.c.b16 %v1008, %v1005
    %v1042 = vpack.c.b16 %v1012, %v1009
    %v1043 = vpack.c.b16 %v1013, %v1010
    %v1044 = vpack.c.b16 %v1014, %v1011
    %v1045 = vpack.c.b16 %v1018, %v1015
    %v1046 = vpack.c.b16 %v1019, %v1016
    %v1047 = vpack.c.b16 %v1020, %v1017
    %v1048 = vpack.c.b16 %v1024, %v1021
    %v1049 = vpack.c.b16 %v1025, %v1022
    %v1050 = vpack.c.b16 %v1026, %v1023
    %1075 = vmatprep.subr.bf16.mxu0 %v1028
    %1076 = vmatpush1.bf16.msra.mxu0 %v1027
    %1077 = vmatprep.subr.bf16.mxu0 %v1031
    %1078 = vmatpush1.bf16.msra.mxu0 %v1030
    %1079 = vmatprep.subr.bf16.mxu0 %v1034
    %1080 = vmatpush1.bf16.msra.mxu0 %v1033
    %1081 = vmatprep.subr.bf16.mxu0 %v1037
    %1082 = vmatpush1.bf16.msra.mxu0 %v1036
    %1083 = vmatprep.subr.bf16.mxu0 %v1040
    %1084 = vmatpush1.bf16.msra.mxu0 %v1039
    %1085 = vmatprep.subr.bf16.mxu0 %v1043
    %1086 = vmatpush1.bf16.msra.mxu0 %v1042
    %1087 = vmatprep.subr.bf16.mxu0 %v1046
    %1088 = vmatpush1.bf16.msra.mxu0 %v1045
    %1089 = vmatprep.subr.bf16.mxu0 %v1049
    %1090 = vmatpush1.bf16.msra.mxu0 %v1048
    %1091 = vmatprep.subr.bf16.mxu0 0
    %1092 = vmatpush1.bf16.msra.mxu0 0
    %1093 = vmatprep.subr.bf16.mxu0 0
    %1094 = vmatpush1.bf16.msra.mxu0 0
    %1095 = vmatprep.subr.bf16.mxu0 0
    %1096 = vmatpush1.bf16.msra.mxu0 0
    %1097 = vmatprep.subr.bf16.mxu0 0
    %1098 = vmatpush1.bf16.msra.mxu0 0
    %1099 = vmatprep.subr.bf16.mxu0 0
    %1100 = vmatpush1.bf16.msra.mxu0 0
    %1101 = vmatprep.subr.bf16.mxu0 0
    %1102 = vmatpush1.bf16.msra.mxu0 0
    %1103 = vmatprep.subr.bf16.mxu0 0
    %1104 = vmatpush1.bf16.msra.mxu0 0
    %1105 = vmatprep.subr.bf16.mxu0 0
    %1106 = vmatpush1.bf16.msra.mxu0 0
    %1107 = vmatprep.mubr.bf16.mxu0 0
    %1108 = vmatmul.mubr.bf16.gmra.mrb[0].mxu0 %v897
    %v1109 = vpop.f32.mrb[0].mxu0
    %v1110 = vadd.f32 %v935, %v1109
    %v1111 = vpop.f32.mrb[0].mxu0
    %v1112 = vadd.f32 %v939, %v1111
    %v1113 = vpop.f32.mrb[0].mxu0
    %v1114 = vpop.f32.mrb[0].mxu0
    %1115 = vdwg.mxu0
    %1116 = vmatprep.subr.bf16.mxu0 0
    %1117 = vmatpush1.bf16.msra.mxu0 %v1029
    %1118 = vmatprep.subr.bf16.mxu0 0
    %1119 = vmatpush1.bf16.msra.mxu0 %v1032
    %1120 = vmatprep.subr.bf16.mxu0 0
    %1121 = vmatpush1.bf16.msra.mxu0 %v1035
    %1122 = vmatprep.subr.bf16.mxu0 0
    %1123 = vmatpush1.bf16.msra.mxu0 %v1038
    %1124 = vmatprep.subr.bf16.mxu0 0
    %1125 = vmatpush1.bf16.msra.mxu0 %v1041
    %1126 = vmatprep.subr.bf16.mxu0 0
    %1127 = vmatpush1.bf16.msra.mxu0 %v1044
    %1128 = vmatprep.subr.bf16.mxu0 0
    %1129 = vmatpush1.bf16.msra.mxu0 %v1047
    %1130 = vmatprep.subr.bf16.mxu0 0
    %1131 = vmatpush1.bf16.msra.mxu0 %v1050
    %1132 = vmatprep.subr.bf16.mxu0 0
    %1133 = vmatpush1.bf16.msra.mxu0 0
    %1134 = vmatprep.subr.bf16.mxu0 0
    %1135 = vmatpush1.bf16.msra.mxu0 0
    %1136 = vmatprep.subr.bf16.mxu0 0
    %1137 = vmatpush1.bf16.msra.mxu0 0
    %1138 = vmatprep.subr.bf16.mxu0 0
    %1139 = vmatpush1.bf16.msra.mxu0 0
    %1140 = vmatprep.subr.bf16.mxu0 0
    %1141 = vmatpush1.bf16.msra.mxu0 0
    %1142 = vmatprep.subr.bf16.mxu0 0
    %1143 = vmatpush1.bf16.msra.mxu0 0
    %1144 = vmatprep.subr.bf16.mxu0 0
    %1145 = vmatpush1.bf16.msra.mxu0 0
    %1146 = vmatprep.subr.bf16.mxu0 0
    %1147 = vmatpush1.bf16.msra.mxu0 0
    %1148 = vmatprep.mubr.bf16.mxu0 0
    %1149 = vmatmul.mubr.bf16.gmra.mrb[0].mxu0 %v897
    %v1150 = vpop.f32.mrb[0].mxu0
    %v1151 = vadd.f32 %v943, %v1150
    %v1152 = vpop.f32.mrb[0].mxu0
    %v1153 = vpop.f32.mrb[0].mxu0
    %v1154 = vpop.f32.mrb[0].mxu0
    %1155 = vdwg.mxu0
    %v1156 = vadd.f32 %v1110, %v577
    %v1157 = vxor.u32 %v1156, 2147483648
    %v1158 = vmul.f32 %v1157, 1.442695
    %v1159 = vpow.pop %v1158
    %v1160 = vadd.f32 %v1159, 1.0
    %v1161 = vrcp.pop %v1160
    %v1162 = vmul.f32 1.0, %v1161
    %v1163 = vadd.f32 %v1112, %v616
    %v1164 = vxor.u32 %v1163, 2147483648
    %v1165 = vmul.f32 %v1164, 1.442695
    %v1166 = vpow.pop %v1165
    %v1167 = vadd.f32 %v1166, 1.0
    %v1168 = vrcp.pop %v1167
    %v1169 = vmul.f32 1.0, %v1168
    %v1170 = vmul.f32 %v1162, %v618
    %v1171 = vadd.f32 %v1151, %v1170
    %v1172 = vtanh.pop %v1171
    %v1173 = vsub.f32 1.0, %v1169
    %v1174 = vmul.f32 %v1173, %v1172
    %v1175 = vmul.f32 %v1169, %v161
    %v1176 = vadd.f32 %v1174, %v1175
    %1177 = vst [vmem:[#allocation2] sm:$0x3] %v1176
    %1178 = vst [vmem:[#allocation19 + $0x2] sm:$0x3] %v1176
    %v1179 = vpack.c.bf16 %v1176, %v1176
    %v1180 = vld [vmem:[#allocation17] sm:$0xf]
    %v1181 = vld [vmem:[#allocation17 + $0x4] sm:$0xf]
    %v1182 = vld [vmem:[#allocation17 + $0x8] sm:$0xf]
    %v1183 = vld [vmem:[#allocation17 + $0xc] sm:$0xf]
    %v1184 = vld [vmem:[#allocation17 + $0x10] sm:$0xf]
    %v1185 = vld [vmem:[#allocation17 + $0x14] sm:$0xf]
    %v1186 = vld [vmem:[#allocation17 + $0x18] sm:$0xf]
    %v1187 = vld [vmem:[#allocation17 + $0x1c] sm:$0xf]
    %v1188 = vld [vmem:[#allocation17 + $0x20] sm:$0xf]
    %v1189 = vld [vmem:[#allocation17 + $0x24] sm:$0xf]
    %v1190 = vld [vmem:[#allocation17 + $0x28] sm:$0xf]
    %v1191 = vld [vmem:[#allocation17 + $0x2c] sm:$0xf]
    %v1192 = vld [vmem:[#allocation17 + $0x30] sm:$0xf]
    %v1193 = vld [vmem:[#allocation17 + $0x34] sm:$0xf]
    %v1194 = vld [vmem:[#allocation17 + $0x38] sm:$0xf]
    %v1195 = vld [vmem:[#allocation17 + $0x3c] sm:$0xf]
    %v1196 = vld [vmem:[%s12] sm:$0x1]
    %v1198 = vlaneseq
    %v1199 = vshrl.u32 %v1198, 7
    %v1200 = vsub.s32 0, %v1199
    %v1201 = vrot.slane %v1196, %v1200
    %v1219 = vunpack.c.l.b16 %v1180
    %v1220 = vunpack.c.l.b16 %v1181
    %v1221 = vunpack.c.l.b16 %v1182
    %v1222 = vunpack.c.l.b16 %v1183
    %v1223 = vunpack.c.l.b16 %v1184
    %v1224 = vunpack.c.l.b16 %v1185
    %v1225 = vunpack.c.l.b16 %v1186
    %v1226 = vunpack.c.l.b16 %v1187
    %v1227 = vunpack.c.l.b16 %v1188
    %v1228 = vunpack.c.l.b16 %v1189
    %v1229 = vunpack.c.l.b16 %v1190
    %v1230 = vunpack.c.l.b16 %v1191
    %v1231 = vunpack.c.l.b16 %v1192
    %v1232 = vunpack.c.l.b16 %v1193
    %v1233 = vunpack.c.l.b16 %v1194
    %v1234 = vunpack.c.l.b16 %v1195
    %v1235 = vpack.c.b16 %v1220, %v1219
    %v1236 = vpack.c.b16 %v1222, %v1221
    %v1237 = vpack.c.b16 %v1224, %v1223
    %v1238 = vpack.c.b16 %v1226, %v1225
    %v1239 = vpack.c.b16 %v1228, %v1227
    %v1240 = vpack.c.b16 %v1230, %v1229
    %v1241 = vpack.c.b16 %v1232, %v1231
    %v1242 = vpack.c.b16 %v1234, %v1233
    %1251 = vmatprep.subr.bf16.mxu0 0
    %1252 = vmatpush1.bf16.msra.mxu0 %v1235
    %1253 = vmatprep.subr.bf16.mxu0 0
    %1254 = vmatpush1.bf16.msra.mxu0 %v1236
    %1255 = vmatprep.subr.bf16.mxu0 0
    %1256 = vmatpush1.bf16.msra.mxu0 %v1237
    %1257 = vmatprep.subr.bf16.mxu0 0
    %1258 = vmatpush1.bf16.msra.mxu0 %v1238
    %1259 = vmatprep.subr.bf16.mxu0 0
    %1260 = vmatpush1.bf16.msra.mxu0 %v1239
    %1261 = vmatprep.subr.bf16.mxu0 0
    %1262 = vmatpush1.bf16.msra.mxu0 %v1240
    %1263 = vmatprep.subr.bf16.mxu0 0
    %1264 = vmatpush1.bf16.msra.mxu0 %v1241
    %1265 = vmatprep.subr.bf16.mxu0 0
    %1266 = vmatpush1.bf16.msra.mxu0 %v1242
    %1267 = vmatprep.subr.bf16.mxu0 0
    %1268 = vmatpush1.bf16.msra.mxu0 0
    %1269 = vmatprep.subr.bf16.mxu0 0
    %1270 = vmatpush1.bf16.msra.mxu0 0
    %1271 = vmatprep.subr.bf16.mxu0 0
    %1272 = vmatpush1.bf16.msra.mxu0 0
    %1273 = vmatprep.subr.bf16.mxu0 0
    %1274 = vmatpush1.bf16.msra.mxu0 0
    %1275 = vmatprep.subr.bf16.mxu0 0
    %1276 = vmatpush1.bf16.msra.mxu0 0
    %1277 = vmatprep.subr.bf16.mxu0 0
    %1278 = vmatpush1.bf16.msra.mxu0 0
    %1279 = vmatprep.subr.bf16.mxu0 0
    %1280 = vmatpush1.bf16.msra.mxu0 0
    %1281 = vmatprep.subr.bf16.mxu0 0
    %1282 = vmatpush1.bf16.msra.mxu0 0
    %1283 = vmatprep.mubr.bf16.mxu0 0
    %1284 = vmatmul.mubr.bf16.gmra.mrb[0].mxu0 %v1179
    %v1285 = vpop.f32.mrb[0].mxu0
    %v1286 = vadd.f32 %v1201, %v1285
    %v1287 = vpop.f32.mrb[0].mxu0
    %v1288 = vpop.f32.mrb[0].mxu0
    %v1289 = vpop.f32.mrb[0].mxu0
    %1290 = vdwg.mxu0
    %1291 = vst [vmem:[#allocation19 + $0x4] sm:$0x3] %v1286
    // Predicated region
    $region86: #{tpu_custom_call.1} parent=1 // pred_check
      _
    $region87: #{tpu_custom_call.1} parent=1 // pred_check_branch
      %1293 = sbr.rel (0) target = $region89
    $region88: #{tpu_custom_call.1} parent=1 // pred_region
      %s1295 = ssub.s32 96, 96
      %1296 = vsyncadd [#allocation7], %s1295
      %s1298 = sshll.u32 [#allocation19], 4
      %s1299 = int_to_ptr.vmem [resolvable:$true] %s1298
      %1301 = dma.vmem_to_hbm [thread:$0]  %s1299, 96, %s13, [#allocation7]
    $region89: #{tpu_custom_call.1} parent=1 // pred_fallthru
      _
    // Predicated region
    $region90: #{tpu_custom_call.1} parent=1 // pred_check
      _
    $region91: #{tpu_custom_call.1} parent=1 // pred_check_branch
      %1303 = sbr.rel (0) target = $region93
    $region92: #{tpu_custom_call.1} parent=1 // pred_region
      %1304 = dma.done [#allocation7], 96
    $region93: #{tpu_custom_call.1} parent=1 // pred_fallthru
      _
    %1305 = vsyncpa [#allocation6], 1
    %1306 = vsyncpa [#allocation9], 1
    %1307 = vsyncpa [#allocation12], 1
    %1308 = vsyncpa [#allocation15], 1
    %1309 = vsyncpa [#allocation18], 1
    %1310 = vsyncpa [#allocation7], 1

</llo_original>
